<compile_context>
chip_gen: v7x
topology: tpu7x:2x2x1
jax: 0.10.0
libtpu: 0.0.40
codegen_flags: <defaults>
</compile_context>

<pallas_src>
import jax
import jax.numpy as jnp
from jax.experimental import pallas as pl
from jax.experimental.pallas import tpu as pltpu

STATE_DIM = 4          # CartPole-v0 observation dim
HIDDEN = [128, 256]
ACTION_DIM = 2         # CartPole-v0 action dim
LANE = 128             # TPU lane width; output layer padded to this


def _round_up(x, m):
    return (x + m - 1) // m * m


def mlp_logits_kernel(x_ref, w1_ref, b1_ref, w2_ref, b2_ref, w3_ref, b3_ref,
                      out_ref):
    """Per-batch-tile fused MLP producing lane-padded logits (TB, 128)."""
    x = x_ref[...]                       # (TB, STATE_DIM) f32
    w1 = w1_ref[...]                     # (STATE_DIM, 128)

    # Layer 1 (K = 4): VPU broadcast-multiply-adds, no MXU round-trip.
    h1 = x[:, 0:1] * w1[0:1, :]
    for k in range(1, STATE_DIM):        # static unroll
        h1 = h1 + x[:, k:k + 1] * w1[k:k + 1, :]
    h1 = jnp.maximum(h1 + b1_ref[...], 0.0)                     # (TB, 128)

    # Layer 2 (128 -> 256): MXU.
    h2 = jnp.dot(h1, w2_ref[...], preferred_element_type=jnp.float32)
    h2 = jnp.maximum(h2 + b2_ref[...], 0.0)                     # (TB, 256)

    # Layer 3 (256 -> 128 lane-padded; real logits live in columns [:ACTION_DIM]).
    logits = jnp.dot(h2, w3_ref[...], preferred_element_type=jnp.float32)
    out_ref[...] = (logits + b3_ref[...]).astype(out_ref.dtype)  # (TB, 128)


def softmax_dim0_kernel(z_ref, p_ref):
    """softmax over axis 0 (the batch axis), matching F.softmax(policy, dim=0)."""
    z = z_ref[...]
    m = jnp.max(z, axis=0, keepdims=True)
    e = jnp.exp(z - m)
    p_ref[...] = (e / jnp.sum(e, axis=0, keepdims=True)).astype(p_ref.dtype)


def actor_forward(state, params):
    """state: [B, STATE_DIM] f32 -> probs: [B, ACTION_DIM] f32 (softmax over dim 0)."""
    w1, b1, w2, b2, w3, b3 = params
    B = state.shape[0]

    # Pad the output layer to lane width (zeros) -> lane-dense matmul/store.
    w3p = jnp.pad(w3, ((0, 0), (0, LANE - ACTION_DIM)))
    b3p = jnp.pad(b3, ((0, 0), (0, LANE - ACTION_DIM)))

    # Batch-row tiling (multiple of 8 sublanes); pad B up if needed.
    TB = min(256, _round_up(B, 8))
    Bp = _round_up(B, TB)
    x = state if Bp == B else jnp.pad(state, ((0, Bp - B), (0, 0)))

    logits = pl.pallas_call(
        mlp_logits_kernel,
        out_shape=jax.ShapeDtypeStruct((Bp, LANE), jnp.float32),
        grid=(Bp // TB,),
        in_specs=[
            pl.BlockSpec((TB, STATE_DIM), lambda i: (i, 0)),       # state tile
            pl.BlockSpec((STATE_DIM, HIDDEN[0]), lambda i: (0, 0)),  # w1 (resident)
            pl.BlockSpec((1, HIDDEN[0]), lambda i: (0, 0)),          # b1
            pl.BlockSpec((HIDDEN[0], HIDDEN[1]), lambda i: (0, 0)),  # w2
            pl.BlockSpec((1, HIDDEN[1]), lambda i: (0, 0)),          # b2
            pl.BlockSpec((HIDDEN[1], LANE), lambda i: (0, 0)),       # w3 (padded)
            pl.BlockSpec((1, LANE), lambda i: (0, 0)),               # b3 (padded)
        ],
        out_specs=pl.BlockSpec((TB, LANE), lambda i: (i, 0)),
        compiler_params=pltpu.CompilerParams(
            dimension_semantics=("parallel",)),
    )(x, w1, b1, w2, b2, w3p, b3p)

    # Drop padded rows BEFORE the batch-axis softmax (they must not enter the
    # normalization), then normalize over dim 0 in a tiny single-program kernel.
    logits = logits[:B]
    vmem = pl.BlockSpec(memory_space=pltpu.MemorySpace.VMEM)
    probs_padded = pl.pallas_call(
        softmax_dim0_kernel,
        out_shape=jax.ShapeDtypeStruct((B, LANE), jnp.float32),
        in_specs=[vmem],
        out_specs=vmem,
    )(logits)

    # Padded logit columns are all-zero -> their softmax columns are garbage-free
    # but meaningless; slice to the real action columns.
    return probs_padded[:, :ACTION_DIM]


def init_params(key):
    """Deterministic init mimicking nn.Linear's U(-1/sqrt(fan_in), 1/sqrt(fan_in))."""
    def linear(key, fan_in, fan_out):
        kw, kb = jax.random.split(key)
        bound = 1.0 / jnp.sqrt(fan_in)
        w = jax.random.uniform(kw, (fan_in, fan_out), jnp.float32, -bound, bound)
        b = jax.random.uniform(kb, (1, fan_out), jnp.float32, -bound, bound)
        return w, b

    k1, k2, k3 = jax.random.split(key, 3)
    w1, b1 = linear(k1, STATE_DIM, HIDDEN[0])
    w2, b2 = linear(k2, HIDDEN[0], HIDDEN[1])
    w3, b3 = linear(k3, HIDDEN[1], ACTION_DIM)
    return (w1, b1, w2, b2, w3, b3)


if __name__ == "__main__":
    key = jax.random.PRNGKey(0)
    k_params, k_state = jax.random.split(key)

    params = init_params(k_params)

    # Amortize launch overhead: many CartPole states per call.
    B = 512
    state = jax.random.normal(k_state, (B, STATE_DIM), jnp.float32)

    forward = jax.jit(actor_forward)
    probs = jax.block_until_ready(forward(state, params))

    # Pure-JAX reference (same math, softmax over dim=0 as in the PyTorch code).
    w1, b1, w2, b2, w3, b3 = params
    hp = jax.lax.Precision.HIGHEST
    h1 = jnp.maximum(jnp.dot(state, w1, precision=hp) + b1, 0.0)
    h2 = jnp.maximum(jnp.dot(h1, w2, precision=hp) + b2, 0.0)
    ref_logits = jnp.dot(h2, w3, precision=hp) + b3
    ref_probs = jax.nn.softmax(ref_logits, axis=0)

    assert probs.shape == (B, ACTION_DIM)
    # softmax over dim=0 -> each column sums to 1
    assert bool(jnp.allclose(jnp.sum(probs, axis=0), 1.0, atol=1e-4))
    assert bool(jnp.allclose(probs, ref_probs, atol=1e-5, rtol=1e-3))

    print("KERNEL_OK")
</pallas_src>

<mosaic_0001>
module attributes {stable_mosaic.version = 11 : i64} {
  func.func @mlp_logits_kernel(%arg0: i32, %arg1: memref<256x4xf32, #tpu.memory_space<vmem>>, %arg2: memref<4x128xf32, #tpu.memory_space<vmem>>, %arg3: memref<1x128xf32, #tpu.memory_space<vmem>>, %arg4: memref<128x256xf32, #tpu.memory_space<vmem>>, %arg5: memref<1x256xf32, #tpu.memory_space<vmem>>, %arg6: memref<256x128xf32, #tpu.memory_space<vmem>>, %arg7: memref<1x128xf32, #tpu.memory_space<vmem>>, %arg8: memref<256x128xf32, #tpu.memory_space<vmem>>) attributes {dimension_semantics = [#tpu.dimension_semantics<parallel>], iteration_bounds = array<i64: 2>, scalar_prefetch = 0 : i64, scratch_operands = 0 : i64, tpu.core_type = #tpu.core_type<tc>, window_params = [{transform_indices = @transform_0, window_bounds = array<i64: 256, 4>}, {pipeline_mode = #tpu.pipeline_mode<synchronous>, transform_indices = @transform_1, window_bounds = array<i64: 4, 128>}, {pipeline_mode = #tpu.pipeline_mode<synchronous>, transform_indices = @transform_2, window_bounds = array<i64: 1, 128>}, {pipeline_mode = #tpu.pipeline_mode<synchronous>, transform_indices = @transform_3, window_bounds = array<i64: 128, 256>}, {pipeline_mode = #tpu.pipeline_mode<synchronous>, transform_indices = @transform_4, window_bounds = array<i64: 1, 256>}, {pipeline_mode = #tpu.pipeline_mode<synchronous>, transform_indices = @transform_5, window_bounds = array<i64: 256, 128>}, {pipeline_mode = #tpu.pipeline_mode<synchronous>, transform_indices = @transform_6, window_bounds = array<i64: 1, 128>}, {transform_indices = @transform_7, window_bounds = array<i64: 256, 128>}]} {
    %c0 = arith.constant 0 : index
    %c0_0 = arith.constant 0 : index
    %0 = vector.load %arg1[%c0, %c0_0] : memref<256x4xf32, #tpu.memory_space<vmem>>, vector<256x4xf32>
    %c0_1 = arith.constant 0 : index
    %c0_2 = arith.constant 0 : index
    %1 = vector.load %arg2[%c0_1, %c0_2] : memref<4x128xf32, #tpu.memory_space<vmem>>, vector<4x128xf32>
    %2 = vector.extract_strided_slice %0 {offsets = [0, 0], sizes = [256, 1], strides = [1, 1]} : vector<256x4xf32> to vector<256x1xf32>
    %3 = vector.extract_strided_slice %1 {offsets = [0, 0], sizes = [1, 128], strides = [1, 1]} : vector<4x128xf32> to vector<1x128xf32>
    %4 = vector.broadcast %2 : vector<256x1xf32> to vector<256x128xf32>
    %5 = vector.broadcast %3 : vector<1x128xf32> to vector<256x128xf32>
    %6 = arith.mulf %4, %5 : vector<256x128xf32>
    %7 = vector.extract_strided_slice %0 {offsets = [0, 1], sizes = [256, 1], strides = [1, 1]} : vector<256x4xf32> to vector<256x1xf32>
    %8 = vector.extract_strided_slice %1 {offsets = [1, 0], sizes = [1, 128], strides = [1, 1]} : vector<4x128xf32> to vector<1x128xf32>
    %9 = vector.broadcast %7 : vector<256x1xf32> to vector<256x128xf32>
    %10 = vector.broadcast %8 : vector<1x128xf32> to vector<256x128xf32>
    %11 = arith.mulf %9, %10 : vector<256x128xf32>
    %12 = arith.addf %6, %11 : vector<256x128xf32>
    %13 = vector.extract_strided_slice %0 {offsets = [0, 2], sizes = [256, 1], strides = [1, 1]} : vector<256x4xf32> to vector<256x1xf32>
    %14 = vector.extract_strided_slice %1 {offsets = [2, 0], sizes = [1, 128], strides = [1, 1]} : vector<4x128xf32> to vector<1x128xf32>
    %15 = vector.broadcast %13 : vector<256x1xf32> to vector<256x128xf32>
    %16 = vector.broadcast %14 : vector<1x128xf32> to vector<256x128xf32>
    %17 = arith.mulf %15, %16 : vector<256x128xf32>
    %18 = arith.addf %12, %17 : vector<256x128xf32>
    %19 = vector.extract_strided_slice %0 {offsets = [0, 3], sizes = [256, 1], strides = [1, 1]} : vector<256x4xf32> to vector<256x1xf32>
    %20 = vector.extract_strided_slice %1 {offsets = [3, 0], sizes = [1, 128], strides = [1, 1]} : vector<4x128xf32> to vector<1x128xf32>
    %21 = vector.broadcast %19 : vector<256x1xf32> to vector<256x128xf32>
    %22 = vector.broadcast %20 : vector<1x128xf32> to vector<256x128xf32>
    %23 = arith.mulf %21, %22 : vector<256x128xf32>
    %24 = arith.addf %18, %23 : vector<256x128xf32>
    %c0_3 = arith.constant 0 : index
    %c0_4 = arith.constant 0 : index
    %25 = vector.load %arg3[%c0_3, %c0_4] : memref<1x128xf32, #tpu.memory_space<vmem>>, vector<1x128xf32>
    %26 = vector.broadcast %25 : vector<1x128xf32> to vector<256x128xf32>
    %27 = arith.addf %24, %26 : vector<256x128xf32>
    %cst = arith.constant 0.000000e+00 : f32
    %28 = vector.broadcast %cst : f32 to vector<256x128xf32>
    %29 = arith.maximumf %27, %28 : vector<256x128xf32>
    %c0_5 = arith.constant 0 : index
    %c0_6 = arith.constant 0 : index
    %30 = vector.load %arg4[%c0_5, %c0_6] : memref<128x256xf32, #tpu.memory_space<vmem>>, vector<128x256xf32>
    %cst_7 = arith.constant dense<0.000000e+00> : vector<256x256xf32>
    %31 = tpu.matmul %29, %30, %cst_7 {dimension_numbers = #tpu.dot_dimension_numbers<[1], [0], [0], [1], [0, 0, 1, 1], [], []>} : vector<256x128xf32>, vector<128x256xf32>, vector<256x256xf32> -> vector<256x256xf32>
    %c0_8 = arith.constant 0 : index
    %c0_9 = arith.constant 0 : index
    %32 = vector.load %arg5[%c0_8, %c0_9] : memref<1x256xf32, #tpu.memory_space<vmem>>, vector<1x256xf32>
    %33 = vector.broadcast %32 : vector<1x256xf32> to vector<256x256xf32>
    %34 = arith.addf %31, %33 : vector<256x256xf32>
    %cst_10 = arith.constant 0.000000e+00 : f32
    %35 = vector.broadcast %cst_10 : f32 to vector<256x256xf32>
    %36 = arith.maximumf %34, %35 : vector<256x256xf32>
    %c0_11 = arith.constant 0 : index
    %c0_12 = arith.constant 0 : index
    %37 = vector.load %arg6[%c0_11, %c0_12] : memref<256x128xf32, #tpu.memory_space<vmem>>, vector<256x128xf32>
    %cst_13 = arith.constant dense<0.000000e+00> : vector<256x128xf32>
    %38 = tpu.matmul %36, %37, %cst_13 {dimension_numbers = #tpu.dot_dimension_numbers<[1], [0], [0], [1], [0, 0, 1, 1], [], []>} : vector<256x256xf32>, vector<256x128xf32>, vector<256x128xf32> -> vector<256x128xf32>
    %c0_14 = arith.constant 0 : index
    %c0_15 = arith.constant 0 : index
    %39 = vector.load %arg7[%c0_14, %c0_15] : memref<1x128xf32, #tpu.memory_space<vmem>>, vector<1x128xf32>
    %40 = vector.broadcast %39 : vector<1x128xf32> to vector<256x128xf32>
    %41 = arith.addf %38, %40 : vector<256x128xf32>
    %c0_16 = arith.constant 0 : index
    %c0_17 = arith.constant 0 : index
    %42 = vector.load %arg8[%c0_16, %c0_17] : memref<256x128xf32, #tpu.memory_space<vmem>>, vector<256x128xf32>
    tpu.vector_store %arg8[%c0_16, %c0_17], %41 {strides = array<i32>} : memref<256x128xf32, #tpu.memory_space<vmem>>, vector<256x128xf32>,
    return
  }
  func.func @transform_0(%arg0: i32) -> (i32, i32) {
    %c0_i32 = arith.constant 0 : i32
    %c0_i32_0 = arith.constant 0 : i32
    return %arg0, %c0_i32 : i32, i32
  }
  func.func @transform_1(%arg0: i32) -> (i32, i32) {
    %c0_i32 = arith.constant 0 : i32
    %c0_i32_0 = arith.constant 0 : i32
    %c0_i32_1 = arith.constant 0 : i32
    return %c0_i32, %c0_i32_0 : i32, i32
  }
  func.func @transform_2(%arg0: i32) -> (i32, i32) {
    %c0_i32 = arith.constant 0 : i32
    %c0_i32_0 = arith.constant 0 : i32
    %c0_i32_1 = arith.constant 0 : i32
    return %c0_i32, %c0_i32_0 : i32, i32
  }
  func.func @transform_3(%arg0: i32) -> (i32, i32) {
    %c0_i32 = arith.constant 0 : i32
    %c0_i32_0 = arith.constant 0 : i32
    %c0_i32_1 = arith.constant 0 : i32
    return %c0_i32, %c0_i32_0 : i32, i32
  }
  func.func @transform_4(%arg0: i32) -> (i32, i32) {
    %c0_i32 = arith.constant 0 : i32
    %c0_i32_0 = arith.constant 0 : i32
    %c0_i32_1 = arith.constant 0 : i32
    return %c0_i32, %c0_i32_0 : i32, i32
  }
  func.func @transform_5(%arg0: i32) -> (i32, i32) {
    %c0_i32 = arith.constant 0 : i32
    %c0_i32_0 = arith.constant 0 : i32
    %c0_i32_1 = arith.constant 0 : i32
    return %c0_i32, %c0_i32_0 : i32, i32
  }
  func.func @transform_6(%arg0: i32) -> (i32, i32) {
    %c0_i32 = arith.constant 0 : i32
    %c0_i32_0 = arith.constant 0 : i32
    %c0_i32_1 = arith.constant 0 : i32
    return %c0_i32, %c0_i32_0 : i32, i32
  }
  func.func @transform_7(%arg0: i32) -> (i32, i32) {
    %c0_i32 = arith.constant 0 : i32
    %c0_i32_0 = arith.constant 0 : i32
    return %arg0, %c0_i32 : i32, i32
  }
}

module attributes {stable_mosaic.version = 11 : i64} {
  func.func @softmax_dim0_kernel(%arg0: memref<512x128xf32, #tpu.memory_space<vmem>>, %arg1: memref<512x128xf32, #tpu.memory_space<vmem>>) attributes {dimension_semantics = [], scalar_prefetch = 0 : i64, scratch_operands = 0 : i64, tpu.core_type = #tpu.core_type<tc>} {
    %c0 = arith.constant 0 : index
    %c0_0 = arith.constant 0 : index
    %0 = vector.load %arg0[%c0, %c0_0] : memref<512x128xf32, #tpu.memory_space<vmem>>, vector<512x128xf32>
    %cst = arith.constant dense<0xFF800000> : vector<128xf32>
    %1 = vector.multi_reduction <maximumf>, %0, %cst [0] : vector<512x128xf32> to vector<128xf32>
    %2 = vector.shape_cast %1 : vector<128xf32> to vector<1x128xf32>
    %3 = vector.broadcast %2 : vector<1x128xf32> to vector<512x128xf32>
    %4 = arith.subf %0, %3 : vector<512x128xf32>
    %5 = math.exp %4 : vector<512x128xf32>
    %cst_1 = arith.constant dense<0.000000e+00> : vector<128xf32>
    %6 = vector.multi_reduction <add>, %5, %cst_1 [0] : vector<512x128xf32> to vector<128xf32>
    %7 = vector.shape_cast %6 : vector<128xf32> to vector<1x128xf32>
    %8 = vector.broadcast %7 : vector<1x128xf32> to vector<512x128xf32>
    %9 = arith.divf %5, %8 : vector<512x128xf32>
    %c0_2 = arith.constant 0 : index
    %c0_3 = arith.constant 0 : index
    %10 = vector.load %arg1[%c0_2, %c0_3] : memref<512x128xf32, #tpu.memory_space<vmem>>, vector<512x128xf32>
    tpu.vector_store %arg1[%c0_2, %c0_3], %9 {strides = array<i32>} : memref<512x128xf32, #tpu.memory_space<vmem>>, vector<512x128xf32>,
    return
  }
}

</mosaic_0001>

<llo_original>
// kernel: actor_forward.3
$region0: #{actor_forward.3}
  #allocation0 [shape = 'u32[]', space=smem, size = 0x4, offset = 0x4, fixed_abs, tag = 'smem constant byte address 0x4 - core index']
  #allocation1 [shape = 'u32[144,128]{1,0:T(1,128)}', space=vmem, size = 0x12000, scoped, tag = 'internal scratch']
  %s0 = inlined_call_operand.vmem [shape: f32[512,128], index: 0, kind: input, shape index: {}]
  %s1 = inlined_call_operand.vmem [shape: f32[512,128], index: 1, kind: output, shape index: {}]
  %s2 = sld [smem:[#allocation0]]
  $region14: #{actor_forward.3} parent=0
    _
  %s4 = ssub.s32 1, %s2
  %s5 = scalar_select 0, %s4, %s2
  // Predicated region
  $region2: #{actor_forward.3} parent=0 // pred_check
    _
  $region3: #{actor_forward.3} parent=0 // pred_check_branch
    %7 = sbr.rel (0) target = $region5
  $region4: #{actor_forward.3} parent=0 // pred_region
    _
  $region5: #{actor_forward.3} parent=0 // pred_fallthru
    _
  %v8 = vld [vmem:[%s0] sm:$0xff]
  %v9 = vld [vmem:[%s0 + $0x8] sm:$0xff]
  %v10 = vld [vmem:[%s0 + $0x10] sm:$0xff]
  %v11 = vld [vmem:[%s0 + $0x18] sm:$0xff]
  %v12 = vld [vmem:[%s0 + $0x20] sm:$0xff]
  %v13 = vld [vmem:[%s0 + $0x28] sm:$0xff]
  %v14 = vld [vmem:[%s0 + $0x30] sm:$0xff]
  %v15 = vld [vmem:[%s0 + $0x38] sm:$0xff]
  %v16 = vld [vmem:[%s0 + $0x40] sm:$0xff]
  %v17 = vld [vmem:[%s0 + $0x48] sm:$0xff]
  %v18 = vld [vmem:[%s0 + $0x50] sm:$0xff]
  %v19 = vld [vmem:[%s0 + $0x58] sm:$0xff]
  %v20 = vld [vmem:[%s0 + $0x60] sm:$0xff]
  %v21 = vld [vmem:[%s0 + $0x68] sm:$0xff]
  %v22 = vld [vmem:[%s0 + $0x70] sm:$0xff]
  %v23 = vld [vmem:[%s0 + $0x78] sm:$0xff]
  %v24 = vld [vmem:[%s0 + $0x80] sm:$0xff]
  %v25 = vld [vmem:[%s0 + $0x88] sm:$0xff]
  %v26 = vld [vmem:[%s0 + $0x90] sm:$0xff]
  %v27 = vld [vmem:[%s0 + $0x98] sm:$0xff]
  %v28 = vld [vmem:[%s0 + $0xa0] sm:$0xff]
  %v29 = vld [vmem:[%s0 + $0xa8] sm:$0xff]
  %v30 = vld [vmem:[%s0 + $0xb0] sm:$0xff]
  %v31 = vld [vmem:[%s0 + $0xb8] sm:$0xff]
  %v32 = vld [vmem:[%s0 + $0xc0] sm:$0xff]
  %v33 = vld [vmem:[%s0 + $0xc8] sm:$0xff]
  %v34 = vld [vmem:[%s0 + $0xd0] sm:$0xff]
  %v35 = vld [vmem:[%s0 + $0xd8] sm:$0xff]
  %v36 = vld [vmem:[%s0 + $0xe0] sm:$0xff]
  %v37 = vld [vmem:[%s0 + $0xe8] sm:$0xff]
  %v38 = vld [vmem:[%s0 + $0xf0] sm:$0xff]
  %v39 = vld [vmem:[%s0 + $0xf8] sm:$0xff]
  %v40 = vld [vmem:[%s0 + $0x100] sm:$0xff]
  %v41 = vld [vmem:[%s0 + $0x108] sm:$0xff]
  %v42 = vld [vmem:[%s0 + $0x110] sm:$0xff]
  %v43 = vld [vmem:[%s0 + $0x118] sm:$0xff]
  %v44 = vld [vmem:[%s0 + $0x120] sm:$0xff]
  %v45 = vld [vmem:[%s0 + $0x128] sm:$0xff]
  %v46 = vld [vmem:[%s0 + $0x130] sm:$0xff]
  %v47 = vld [vmem:[%s0 + $0x138] sm:$0xff]
  %v48 = vld [vmem:[%s0 + $0x140] sm:$0xff]
  %v49 = vld [vmem:[%s0 + $0x148] sm:$0xff]
  %v50 = vld [vmem:[%s0 + $0x150] sm:$0xff]
  %v51 = vld [vmem:[%s0 + $0x158] sm:$0xff]
  %v52 = vld [vmem:[%s0 + $0x160] sm:$0xff]
  %v53 = vld [vmem:[%s0 + $0x168] sm:$0xff]
  %v54 = vld [vmem:[%s0 + $0x170] sm:$0xff]
  %v55 = vld [vmem:[%s0 + $0x178] sm:$0xff]
  %v56 = vld [vmem:[%s0 + $0x180] sm:$0xff]
  %v57 = vld [vmem:[%s0 + $0x188] sm:$0xff]
  %v58 = vld [vmem:[%s0 + $0x190] sm:$0xff]
  %v59 = vld [vmem:[%s0 + $0x198] sm:$0xff]
  %v60 = vld [vmem:[%s0 + $0x1a0] sm:$0xff]
  %v61 = vld [vmem:[%s0 + $0x1a8] sm:$0xff]
  %v62 = vld [vmem:[%s0 + $0x1b0] sm:$0xff]
  %v63 = vld [vmem:[%s0 + $0x1b8] sm:$0xff]
  %v64 = vld [vmem:[%s0 + $0x1c0] sm:$0xff]
  %v65 = vld [vmem:[%s0 + $0x1c8] sm:$0xff]
  %v66 = vld [vmem:[%s0 + $0x1d0] sm:$0xff]
  %v67 = vld [vmem:[%s0 + $0x1d8] sm:$0xff]
  %v68 = vld [vmem:[%s0 + $0x1e0] sm:$0xff]
  %v69 = vld [vmem:[%s0 + $0x1e8] sm:$0xff]
  %v70 = vld [vmem:[%s0 + $0x1f0] sm:$0xff]
  %v71 = vld [vmem:[%s0 + $0x1f8] sm:$0xff]
  %v72 = vmax.f32 %v8, %v12
  %v73 = vmax.f32 %v9, %v13
  %v74 = vmax.f32 %v10, %v14
  %v75 = vmax.f32 %v11, %v15
  %v76 = vmax.f32 %v72, %v16
  %v77 = vmax.f32 %v73, %v17
  %v78 = vmax.f32 %v74, %v18
  %v79 = vmax.f32 %v75, %v19
  %v80 = vmax.f32 %v76, %v20
  %v81 = vmax.f32 %v77, %v21
  %v82 = vmax.f32 %v78, %v22
  %v83 = vmax.f32 %v79, %v23
  %v84 = vmax.f32 %v80, %v24
  %v85 = vmax.f32 %v81, %v25
  %v86 = vmax.f32 %v82, %v26
  %v87 = vmax.f32 %v83, %v27
  %v88 = vmax.f32 %v84, %v28
  %v89 = vmax.f32 %v85, %v29
  %v90 = vmax.f32 %v86, %v30
  %v91 = vmax.f32 %v87, %v31
  %v92 = vmax.f32 %v88, %v32
  %v93 = vmax.f32 %v89, %v33
  %v94 = vmax.f32 %v90, %v34
  %v95 = vmax.f32 %v91, %v35
  %v96 = vmax.f32 %v92, %v36
  %v97 = vmax.f32 %v93, %v37
  %v98 = vmax.f32 %v94, %v38
  %v99 = vmax.f32 %v95, %v39
  %v100 = vmax.f32 %v96, %v40
  %v101 = vmax.f32 %v97, %v41
  %v102 = vmax.f32 %v98, %v42
  %v103 = vmax.f32 %v99, %v43
  %v104 = vmax.f32 %v100, %v44
  %v105 = vmax.f32 %v101, %v45
  %v106 = vmax.f32 %v102, %v46
  %v107 = vmax.f32 %v103, %v47
  %v108 = vmax.f32 %v104, %v48
  %v109 = vmax.f32 %v105, %v49
  %v110 = vmax.f32 %v106, %v50
  %v111 = vmax.f32 %v107, %v51
  %v112 = vmax.f32 %v108, %v52
  %v113 = vmax.f32 %v109, %v53
  %v114 = vmax.f32 %v110, %v54
  %v115 = vmax.f32 %v111, %v55
  %v116 = vmax.f32 %v112, %v56
  %v117 = vmax.f32 %v113, %v57
  %v118 = vmax.f32 %v114, %v58
  %v119 = vmax.f32 %v115, %v59
  %v120 = vmax.f32 %v116, %v60
  %v121 = vmax.f32 %v117, %v61
  %v122 = vmax.f32 %v118, %v62
  %v123 = vmax.f32 %v119, %v63
  %v124 = vmax.f32 %v120, %v64
  %v125 = vmax.f32 %v121, %v65
  %v126 = vmax.f32 %v122, %v66
  %v127 = vmax.f32 %v123, %v67
  %v128 = vmax.f32 %v124, %v68
  %v129 = vmax.f32 %v125, %v69
  %v130 = vmax.f32 %v126, %v70
  %v131 = vmax.f32 %v127, %v71
  %v132 = vmax.f32 %v128, %v129
  %v133 = vmax.f32 %v130, %v131
  %v134 = vmax.f32 %v132, %v133
  %v135 = vrot.slane %v134, 4
  %v136 = vmax.f32 %v134, %v135
  %v137 = vrot.slane %v136, 2
  %v138 = vmax.f32 %v136, %v137
  %v139 = vrot.slane %v138, 1
  %v140 = vmax.f32 %v138, %v139
  %v141 = vsub.f32 %v8, %v140
  %v142 = vsub.f32 %v9, %v140
  %v143 = vsub.f32 %v10, %v140
  %v144 = vsub.f32 %v11, %v140
  %v145 = vsub.f32 %v12, %v140
  %v146 = vsub.f32 %v13, %v140
  %v147 = vsub.f32 %v14, %v140
  %v148 = vsub.f32 %v15, %v140
  %v149 = vsub.f32 %v16, %v140
  %v150 = vsub.f32 %v17, %v140
  %v151 = vsub.f32 %v18, %v140
  %v152 = vsub.f32 %v19, %v140
  %v153 = vsub.f32 %v20, %v140
  %v154 = vsub.f32 %v21, %v140
  %v155 = vsub.f32 %v22, %v140
  %v156 = vsub.f32 %v23, %v140
  %v157 = vsub.f32 %v24, %v140
  %v158 = vsub.f32 %v25, %v140
  %v159 = vsub.f32 %v26, %v140
  %v160 = vsub.f32 %v27, %v140
  %v161 = vsub.f32 %v28, %v140
  %v162 = vsub.f32 %v29, %v140
  %v163 = vsub.f32 %v30, %v140
  %v164 = vsub.f32 %v31, %v140
  %v165 = vsub.f32 %v32, %v140
  %v166 = vsub.f32 %v33, %v140
  %v167 = vsub.f32 %v34, %v140
  %v168 = vsub.f32 %v35, %v140
  %v169 = vsub.f32 %v36, %v140
  %v170 = vsub.f32 %v37, %v140
  %v171 = vsub.f32 %v38, %v140
  %v172 = vsub.f32 %v39, %v140
  %v173 = vsub.f32 %v40, %v140
  %v174 = vsub.f32 %v41, %v140
  %v175 = vsub.f32 %v42, %v140
  %v176 = vsub.f32 %v43, %v140
  %v177 = vsub.f32 %v44, %v140
  %v178 = vsub.f32 %v45, %v140
  %v179 = vsub.f32 %v46, %v140
  %v180 = vsub.f32 %v47, %v140
  %v181 = vsub.f32 %v48, %v140
  %v182 = vsub.f32 %v49, %v140
  %v183 = vsub.f32 %v50, %v140
  %v184 = vsub.f32 %v51, %v140
  %v185 = vsub.f32 %v52, %v140
  %v186 = vsub.f32 %v53, %v140
  %v187 = vsub.f32 %v54, %v140
  %v188 = vsub.f32 %v55, %v140
  %v189 = vsub.f32 %v56, %v140
  %v190 = vsub.f32 %v57, %v140
  %v191 = vsub.f32 %v58, %v140
  %v192 = vsub.f32 %v59, %v140
  %v193 = vsub.f32 %v60, %v140
  %v194 = vsub.f32 %v61, %v140
  %v195 = vsub.f32 %v62, %v140
  %v196 = vsub.f32 %v63, %v140
  %v197 = vsub.f32 %v64, %v140
  %v198 = vsub.f32 %v65, %v140
  %v199 = vsub.f32 %v66, %v140
  %v200 = vsub.f32 %v67, %v140
  %v201 = vsub.f32 %v68, %v140
  %v202 = vsub.f32 %v69, %v140
  %v203 = vsub.f32 %v70, %v140
  %v204 = vsub.f32 %v71, %v140
  %v205 = vmul.f32 %v141, 1.442695
  %v206 = vpow.pop %v205
  %v207 = vmul.f32 %v142, 1.442695
  %v208 = vpow.pop %v207
  %v209 = vmul.f32 %v143, 1.442695
  %v210 = vpow.pop %v209
  %v211 = vmul.f32 %v144, 1.442695
  %v212 = vpow.pop %v211
  %v213 = vmul.f32 %v145, 1.442695
  %v214 = vpow.pop %v213
  %v215 = vmul.f32 %v146, 1.442695
  %v216 = vpow.pop %v215
  %v217 = vmul.f32 %v147, 1.442695
  %v218 = vpow.pop %v217
  %v219 = vmul.f32 %v148, 1.442695
  %v220 = vpow.pop %v219
  %v221 = vmul.f32 %v149, 1.442695
  %v222 = vpow.pop %v221
  %v223 = vmul.f32 %v150, 1.442695
  %v224 = vpow.pop %v223
  %v225 = vmul.f32 %v151, 1.442695
  %v226 = vpow.pop %v225
  %v227 = vmul.f32 %v152, 1.442695
  %v228 = vpow.pop %v227
  %v229 = vmul.f32 %v153, 1.442695
  %v230 = vpow.pop %v229
  %v231 = vmul.f32 %v154, 1.442695
  %v232 = vpow.pop %v231
  %v233 = vmul.f32 %v155, 1.442695
  %v234 = vpow.pop %v233
  %v235 = vmul.f32 %v156, 1.442695
  %v236 = vpow.pop %v235
  %v237 = vmul.f32 %v157, 1.442695
  %v238 = vpow.pop %v237
  %v239 = vmul.f32 %v158, 1.442695
  %v240 = vpow.pop %v239
  %v241 = vmul.f32 %v159, 1.442695
  %v242 = vpow.pop %v241
  %v243 = vmul.f32 %v160, 1.442695
  %v244 = vpow.pop %v243
  %v245 = vmul.f32 %v161, 1.442695
  %v246 = vpow.pop %v245
  %v247 = vmul.f32 %v162, 1.442695
  %v248 = vpow.pop %v247
  %v249 = vmul.f32 %v163, 1.442695
  %v250 = vpow.pop %v249
  %v251 = vmul.f32 %v164, 1.442695
  %v252 = vpow.pop %v251
  %v253 = vmul.f32 %v165, 1.442695
  %v254 = vpow.pop %v253
  %v255 = vmul.f32 %v166, 1.442695
  %v256 = vpow.pop %v255
  %v257 = vmul.f32 %v167, 1.442695
  %v258 = vpow.pop %v257
  %v259 = vmul.f32 %v168, 1.442695
  %v260 = vpow.pop %v259
  %v261 = vmul.f32 %v169, 1.442695
  %v262 = vpow.pop %v261
  %v263 = vmul.f32 %v170, 1.442695
  %v264 = vpow.pop %v263
  %v265 = vmul.f32 %v171, 1.442695
  %v266 = vpow.pop %v265
  %v267 = vmul.f32 %v172, 1.442695
  %v268 = vpow.pop %v267
  %v269 = vmul.f32 %v173, 1.442695
  %v270 = vpow.pop %v269
  %v271 = vmul.f32 %v174, 1.442695
  %v272 = vpow.pop %v271
  %v273 = vmul.f32 %v175, 1.442695
  %v274 = vpow.pop %v273
  %v275 = vmul.f32 %v176, 1.442695
  %v276 = vpow.pop %v275
  %v277 = vmul.f32 %v177, 1.442695
  %v278 = vpow.pop %v277
  %v279 = vmul.f32 %v178, 1.442695
  %v280 = vpow.pop %v279
  %v281 = vmul.f32 %v179, 1.442695
  %v282 = vpow.pop %v281
  %v283 = vmul.f32 %v180, 1.442695
  %v284 = vpow.pop %v283
  %v285 = vmul.f32 %v181, 1.442695
  %v286 = vpow.pop %v285
  %v287 = vmul.f32 %v182, 1.442695
  %v288 = vpow.pop %v287
  %v289 = vmul.f32 %v183, 1.442695
  %v290 = vpow.pop %v289
  %v291 = vmul.f32 %v184, 1.442695
  %v292 = vpow.pop %v291
  %v293 = vmul.f32 %v185, 1.442695
  %v294 = vpow.pop %v293
  %v295 = vmul.f32 %v186, 1.442695
  %v296 = vpow.pop %v295
  %v297 = vmul.f32 %v187, 1.442695
  %v298 = vpow.pop %v297
  %v299 = vmul.f32 %v188, 1.442695
  %v300 = vpow.pop %v299
  %v301 = vmul.f32 %v189, 1.442695
  %v302 = vpow.pop %v301
  %v303 = vmul.f32 %v190, 1.442695
  %v304 = vpow.pop %v303
  %v305 = vmul.f32 %v191, 1.442695
  %v306 = vpow.pop %v305
  %v307 = vmul.f32 %v192, 1.442695
  %v308 = vpow.pop %v307
  %v309 = vmul.f32 %v193, 1.442695
  %v310 = vpow.pop %v309
  %v311 = vmul.f32 %v194, 1.442695
  %v312 = vpow.pop %v311
  %v313 = vmul.f32 %v195, 1.442695
  %v314 = vpow.pop %v313
  %v315 = vmul.f32 %v196, 1.442695
  %v316 = vpow.pop %v315
  %v317 = vmul.f32 %v197, 1.442695
  %v318 = vpow.pop %v317
  %v319 = vmul.f32 %v198, 1.442695
  %v320 = vpow.pop %v319
  %v321 = vmul.f32 %v199, 1.442695
  %v322 = vpow.pop %v321
  %v323 = vmul.f32 %v200, 1.442695
  %v324 = vpow.pop %v323
  %v325 = vmul.f32 %v201, 1.442695
  %v326 = vpow.pop %v325
  %v327 = vmul.f32 %v202, 1.442695
  %v328 = vpow.pop %v327
  %v329 = vmul.f32 %v203, 1.442695
  %v330 = vpow.pop %v329
  %v331 = vmul.f32 %v204, 1.442695
  %v332 = vpow.pop %v331
  %v333 = vadd.f32 %v206, %v208
  %v334 = vadd.f32 %v333, %v210
  %v335 = vadd.f32 %v334, %v212
  %v336 = vadd.f32 %v335, %v214
  %v337 = vadd.f32 %v336, %v216
  %v338 = vadd.f32 %v337, %v218
  %v339 = vadd.f32 %v338, %v220
  %v340 = vadd.f32 %v339, %v222
  %v341 = vadd.f32 %v340, %v224
  %v342 = vadd.f32 %v341, %v226
  %v343 = vadd.f32 %v342, %v228
  %v344 = vadd.f32 %v343, %v230
  %v345 = vadd.f32 %v344, %v232
  %v346 = vadd.f32 %v345, %v234
  %v347 = vadd.f32 %v346, %v236
  %v348 = vadd.f32 %v347, %v238
  %v349 = vadd.f32 %v348, %v240
  %v350 = vadd.f32 %v349, %v242
  %v351 = vadd.f32 %v350, %v244
  %v352 = vadd.f32 %v351, %v246
  %v353 = vadd.f32 %v352, %v248
  %v354 = vadd.f32 %v353, %v250
  %v355 = vadd.f32 %v354, %v252
  %v356 = vadd.f32 %v355, %v254
  %v357 = vadd.f32 %v356, %v256
  %v358 = vadd.f32 %v357, %v258
  %v359 = vadd.f32 %v358, %v260
  %v360 = vadd.f32 %v359, %v262
  %v361 = vadd.f32 %v360, %v264
  %v362 = vadd.f32 %v361, %v266
  %v363 = vadd.f32 %v362, %v268
  %v364 = vadd.f32 %v363, %v270
  %v365 = vadd.f32 %v364, %v272
  %v366 = vadd.f32 %v365, %v274
  %v367 = vadd.f32 %v366, %v276
  %v368 = vadd.f32 %v367, %v278
  %v369 = vadd.f32 %v368, %v280
  %v370 = vadd.f32 %v369, %v282
  %v371 = vadd.f32 %v370, %v284
  %v372 = vadd.f32 %v371, %v286
  %v373 = vadd.f32 %v372, %v288
  %v374 = vadd.f32 %v373, %v290
  %v375 = vadd.f32 %v374, %v292
  %v376 = vadd.f32 %v375, %v294
  %v377 = vadd.f32 %v376, %v296
  %v378 = vadd.f32 %v377, %v298
  %v379 = vadd.f32 %v378, %v300
  %v380 = vadd.f32 %v379, %v302
  %v381 = vadd.f32 %v380, %v304
  %v382 = vadd.f32 %v381, %v306
  %v383 = vadd.f32 %v382, %v308
  %v384 = vadd.f32 %v383, %v310
  %v385 = vadd.f32 %v384, %v312
  %v386 = vadd.f32 %v385, %v314
  %v387 = vadd.f32 %v386, %v316
  %v388 = vadd.f32 %v387, %v318
  %v389 = vadd.f32 %v388, %v320
  %v390 = vadd.f32 %v389, %v322
  %v391 = vadd.f32 %v390, %v324
  %v392 = vadd.f32 %v391, %v326
  %v393 = vadd.f32 %v392, %v328
  %v394 = vadd.f32 %v393, %v330
  %v395 = vadd.f32 %v394, %v332
  %v396 = vrot.slane %v395, 4
  %v397 = vadd.f32 %v395, %v396
  %v398 = vrot.slane %v397, 2
  %v399 = vadd.f32 %v397, %v398
  %v400 = vrot.slane %v399, 1
  %v401 = vadd.f32 %v399, %v400
  %v402 = vrcp.pop %v401
  %v403 = vmul.f32 %v206, %v402
  %v404 = vmul.f32 %v208, %v402
  %v405 = vmul.f32 %v210, %v402
  %v406 = vmul.f32 %v212, %v402
  %v407 = vmul.f32 %v214, %v402
  %v408 = vmul.f32 %v216, %v402
  %v409 = vmul.f32 %v218, %v402
  %v410 = vmul.f32 %v220, %v402
  %v411 = vmul.f32 %v222, %v402
  %v412 = vmul.f32 %v224, %v402
  %v413 = vmul.f32 %v226, %v402
  %v414 = vmul.f32 %v228, %v402
  %v415 = vmul.f32 %v230, %v402
  %v416 = vmul.f32 %v232, %v402
  %v417 = vmul.f32 %v234, %v402
  %v418 = vmul.f32 %v236, %v402
  %v419 = vmul.f32 %v238, %v402
  %v420 = vmul.f32 %v240, %v402
  %v421 = vmul.f32 %v242, %v402
  %v422 = vmul.f32 %v244, %v402
  %v423 = vmul.f32 %v246, %v402
  %v424 = vmul.f32 %v248, %v402
  %v425 = vmul.f32 %v250, %v402
  %v426 = vmul.f32 %v252, %v402
  %v427 = vmul.f32 %v254, %v402
  %v428 = vmul.f32 %v256, %v402
  %v429 = vmul.f32 %v258, %v402
  %v430 = vmul.f32 %v260, %v402
  %v431 = vmul.f32 %v262, %v402
  %v432 = vmul.f32 %v264, %v402
  %v433 = vmul.f32 %v266, %v402
  %v434 = vmul.f32 %v268, %v402
  %v435 = vmul.f32 %v270, %v402
  %v436 = vmul.f32 %v272, %v402
  %v437 = vmul.f32 %v274, %v402
  %v438 = vmul.f32 %v276, %v402
  %v439 = vmul.f32 %v278, %v402
  %v440 = vmul.f32 %v280, %v402
  %v441 = vmul.f32 %v282, %v402
  %v442 = vmul.f32 %v284, %v402
  %v443 = vmul.f32 %v286, %v402
  %v444 = vmul.f32 %v288, %v402
  %v445 = vmul.f32 %v290, %v402
  %v446 = vmul.f32 %v292, %v402
  %v447 = vmul.f32 %v294, %v402
  %v448 = vmul.f32 %v296, %v402
  %v449 = vmul.f32 %v298, %v402
  %v450 = vmul.f32 %v300, %v402
  %v451 = vmul.f32 %v302, %v402
  %v452 = vmul.f32 %v304, %v402
  %v453 = vmul.f32 %v306, %v402
  %v454 = vmul.f32 %v308, %v402
  %v455 = vmul.f32 %v310, %v402
  %v456 = vmul.f32 %v312, %v402
  %v457 = vmul.f32 %v314, %v402
  %v458 = vmul.f32 %v316, %v402
  %v459 = vmul.f32 %v318, %v402
  %v460 = vmul.f32 %v320, %v402
  %v461 = vmul.f32 %v322, %v402
  %v462 = vmul.f32 %v324, %v402
  %v463 = vmul.f32 %v326, %v402
  %v464 = vmul.f32 %v328, %v402
  %v465 = vmul.f32 %v330, %v402
  %v466 = vmul.f32 %v332, %v402
  %467 = vst [vmem:[%s1] sm:$0xff] %v403
  %468 = vst [vmem:[%s1 + $0x8] sm:$0xff] %v404
  %469 = vst [vmem:[%s1 + $0x10] sm:$0xff] %v405
  %470 = vst [vmem:[%s1 + $0x18] sm:$0xff] %v406
  %471 = vst [vmem:[%s1 + $0x20] sm:$0xff] %v407
  %472 = vst [vmem:[%s1 + $0x28] sm:$0xff] %v408
  %473 = vst [vmem:[%s1 + $0x30] sm:$0xff] %v409
  %474 = vst [vmem:[%s1 + $0x38] sm:$0xff] %v410
  %475 = vst [vmem:[%s1 + $0x40] sm:$0xff] %v411
  %476 = vst [vmem:[%s1 + $0x48] sm:$0xff] %v412
  %477 = vst [vmem:[%s1 + $0x50] sm:$0xff] %v413
  %478 = vst [vmem:[%s1 + $0x58] sm:$0xff] %v414
  %479 = vst [vmem:[%s1 + $0x60] sm:$0xff] %v415
  %480 = vst [vmem:[%s1 + $0x68] sm:$0xff] %v416
  %481 = vst [vmem:[%s1 + $0x70] sm:$0xff] %v417
  %482 = vst [vmem:[%s1 + $0x78] sm:$0xff] %v418
  %483 = vst [vmem:[%s1 + $0x80] sm:$0xff] %v419
  %484 = vst [vmem:[%s1 + $0x88] sm:$0xff] %v420
  %485 = vst [vmem:[%s1 + $0x90] sm:$0xff] %v421
  %486 = vst [vmem:[%s1 + $0x98] sm:$0xff] %v422
  %487 = vst [vmem:[%s1 + $0xa0] sm:$0xff] %v423
  %488 = vst [vmem:[%s1 + $0xa8] sm:$0xff] %v424
  %489 = vst [vmem:[%s1 + $0xb0] sm:$0xff] %v425
  %490 = vst [vmem:[%s1 + $0xb8] sm:$0xff] %v426
  %491 = vst [vmem:[%s1 + $0xc0] sm:$0xff] %v427
  %492 = vst [vmem:[%s1 + $0xc8] sm:$0xff] %v428
  %493 = vst [vmem:[%s1 + $0xd0] sm:$0xff] %v429
  %494 = vst [vmem:[%s1 + $0xd8] sm:$0xff] %v430
  %495 = vst [vmem:[%s1 + $0xe0] sm:$0xff] %v431
  %496 = vst [vmem:[%s1 + $0xe8] sm:$0xff] %v432
  %497 = vst [vmem:[%s1 + $0xf0] sm:$0xff] %v433
  %498 = vst [vmem:[%s1 + $0xf8] sm:$0xff] %v434
  %499 = vst [vmem:[%s1 + $0x100] sm:$0xff] %v435
  %500 = vst [vmem:[%s1 + $0x108] sm:$0xff] %v436
  %501 = vst [vmem:[%s1 + $0x110] sm:$0xff] %v437
  %502 = vst [vmem:[%s1 + $0x118] sm:$0xff] %v438
  %503 = vst [vmem:[%s1 + $0x120] sm:$0xff] %v439
  %504 = vst [vmem:[%s1 + $0x128] sm:$0xff] %v440
  %505 = vst [vmem:[%s1 + $0x130] sm:$0xff] %v441
  %506 = vst [vmem:[%s1 + $0x138] sm:$0xff] %v442
  %507 = vst [vmem:[%s1 + $0x140] sm:$0xff] %v443
  %508 = vst [vmem:[%s1 + $0x148] sm:$0xff] %v444
  %509 = vst [vmem:[%s1 + $0x150] sm:$0xff] %v445
  %510 = vst [vmem:[%s1 + $0x158] sm:$0xff] %v446
  %511 = vst [vmem:[%s1 + $0x160] sm:$0xff] %v447
  %512 = vst [vmem:[%s1 + $0x168] sm:$0xff] %v448
  %513 = vst [vmem:[%s1 + $0x170] sm:$0xff] %v449
  %514 = vst [vmem:[%s1 + $0x178] sm:$0xff] %v450
  %515 = vst [vmem:[%s1 + $0x180] sm:$0xff] %v451
  %516 = vst [vmem:[%s1 + $0x188] sm:$0xff] %v452
  %517 = vst [vmem:[%s1 + $0x190] sm:$0xff] %v453
  %518 = vst [vmem:[%s1 + $0x198] sm:$0xff] %v454
  %519 = vst [vmem:[%s1 + $0x1a0] sm:$0xff] %v455
  %520 = vst [vmem:[%s1 + $0x1a8] sm:$0xff] %v456
  %521 = vst [vmem:[%s1 + $0x1b0] sm:$0xff] %v457
  %522 = vst [vmem:[%s1 + $0x1b8] sm:$0xff] %v458
  %523 = vst [vmem:[%s1 + $0x1c0] sm:$0xff] %v459
  %524 = vst [vmem:[%s1 + $0x1c8] sm:$0xff] %v460
  %525 = vst [vmem:[%s1 + $0x1d0] sm:$0xff] %v461
  %526 = vst [vmem:[%s1 + $0x1d8] sm:$0xff] %v462
  %527 = vst [vmem:[%s1 + $0x1e0] sm:$0xff] %v463
  %528 = vst [vmem:[%s1 + $0x1e8] sm:$0xff] %v464
  %529 = vst [vmem:[%s1 + $0x1f0] sm:$0xff] %v465
  %530 = vst [vmem:[%s1 + $0x1f8] sm:$0xff] %v466
  // Predicated region
  $region6: #{actor_forward.3} parent=0 // pred_check
    _
  $region7: #{actor_forward.3} parent=0 // pred_check_branch
    %532 = sbr.rel (0) target = $region9
  $region8: #{actor_forward.3} parent=0 // pred_region
    _
  $region9: #{actor_forward.3} parent=0 // pred_fallthru
    _
  // Predicated region
  $region10: #{actor_forward.3} parent=0 // pred_check
    _
  $region11: #{actor_forward.3} parent=0 // pred_check_branch
    %534 = sbr.rel (0) target = $region13
  $region12: #{actor_forward.3} parent=0 // pred_region
    _
  $region13: #{actor_forward.3} parent=0 // pred_fallthru
    _

// kernel: actor_forward.2
$region0: #{actor_forward.2}
  #allocation0 [shape = 'u32[]', space=smem, size = 0x4, offset = 0x4, fixed_abs, tag = 'smem constant byte address 0x4 - core index']
  #allocation1 [shape = 'u32[144,128]{1,0:T(1,128)}', space=vmem, size = 0x12000, scoped, tag = 'internal scratch']
  %s0 = inlined_call_operand.vmem [shape: f32[512,4], index: 0, kind: input, shape index: {}]
  %s1 = inlined_call_operand.vmem [shape: f32[4,128], index: 1, kind: input, shape index: {}]
  %s2 = inlined_call_operand.vmem [shape: f32[1,128], index: 2, kind: input, shape index: {}]
  %s3 = inlined_call_operand.vmem [shape: f32[128,256], index: 3, kind: input, shape index: {}]
  %s4 = inlined_call_operand.vmem [shape: f32[1,256], index: 4, kind: input, shape index: {}]
  %s5 = inlined_call_operand.vmem [shape: f32[256,128], index: 5, kind: input, shape index: {}]
  %s6 = inlined_call_operand.vmem [shape: f32[1,128], index: 6, kind: input, shape index: {}]
  %s7 = inlined_call_operand.vmem [shape: f32[512,128], index: 7, kind: output, shape index: {}]
  %s8 = sld [smem:[#allocation0]]
  $region61: #{actor_forward.2} parent=0
    _
  %s10 = ssub.s32 1, %s8
  %s11 = scalar_select 0, %s10, %s8
  loop: start=0, step=1, limit=4
  $region2: #{actor_forward.2} parent=0 // loop_pre_header
    _
  $region3: #{actor_forward.2} parent=0 // loop_header
    %s13 = sphi 0, %s17
    %p14 = scmp.ge.s32.totalorder %s13, 4
    %s23 = sphi 0, %s25
    %s26 = sphi 0, %s23
    %s27 = sphi 0, %s26
    %s43 = sphi 0, %s27
    %s47 = sphi 0, %s47
    %s49 = sphi 0, %s47
    %s50 = sphi 0, %s49
    %s64 = sphi 0, %s50
    %s68 = sphi 0, %s68
    %s70 = sphi 0, %s68
    %s71 = sphi 0, %s70
    %s85 = sphi 0, %s71
    %s89 = sphi 0, %s89
    %s91 = sphi 0, %s89
    %s92 = sphi 0, %s91
    %s106 = sphi 0, %s92
    %s110 = sphi 0, %s110
    %s112 = sphi 0, %s110
    %s113 = sphi 0, %s112
    %s127 = sphi 0, %s113
    %s131 = sphi 0, %s131
    %s133 = sphi 0, %s131
    %s134 = sphi 0, %s133
    %s148 = sphi 0, %s134
    %s152 = sphi 0, %s152
    %s154 = sphi 0, %s152
    %s155 = sphi 0, %s154
    %s169 = sphi 0, %s155
    %s175 = sphi 0, %s177
    %s178 = sphi 0, %s175
    %s179 = sphi 0, %s178
    %s195 = sphi 0, %s179
  $region4: #{actor_forward.2} parent=0 // loop_header_branch
    %16 = sbr.rel (%p14) target = $region8
  $region5: #{actor_forward.2} parent=0 // loop_body
    %s18 = ssub.s32 %s13, 1
    %s19 = ssub.s32 %s13, 2
    %s20 = sadd.s32 %s13, 1
    %s21 = ssub.s32 %s13, %s20
    %p22 = scmp.eq.s32.totalorder %s21, 0
    %s24 = sadd.s32 %s23, 1
    %s25 = scalar_select %p22, %s23, %s24
    %p28 = pneg %p22
    %p29 = scmp.eq.s32.totalorder %s13, 1
    %p30 = por %p28, %p29
    %p31 = scmp.ne.s32.totalorder %s23, %s26
    %p32 = scmp.eq.s32.totalorder %s13, 0
    %p33 = por %p31, %p32
    %p34 = scmp.ne.s32.totalorder %s23, %s26
    %p35 = scmp.eq.s32.totalorder %s18, 1
    %p36 = por %p34, %p35
    %p37 = scmp.ne.s32.totalorder %s26, %s27
    %p38 = scmp.eq.s32.totalorder %s18, 0
    %p39 = por %p37, %p38
    %p40 = scmp.ne.s32.totalorder %s26, %s27
    %p41 = scmp.eq.s32.totalorder %s19, 1
    %p42 = por %p40, %p41
    %p44 = scmp.ne.s32.totalorder %s27, %s43
    %p45 = scmp.eq.s32.totalorder %s19, 0
    %p46 = por %p44, %p45
    %s48 = sadd.s32 %s47, 1
    %p51 = scmp.eq.s32.totalorder %s13, 1
    %p52 = scmp.ne.s32.totalorder %s47, %s49
    %p53 = scmp.eq.s32.totalorder %s13, 0
    %p54 = por %p52, %p53
    %p55 = scmp.ne.s32.totalorder %s47, %s49
    %p56 = scmp.eq.s32.totalorder %s18, 1
    %p57 = por %p55, %p56
    %p58 = scmp.ne.s32.totalorder %s49, %s50
    %p59 = scmp.eq.s32.totalorder %s18, 0
    %p60 = por %p58, %p59
    %p61 = scmp.ne.s32.totalorder %s49, %s50
    %p62 = scmp.eq.s32.totalorder %s19, 1
    %p63 = por %p61, %p62
    %p65 = scmp.ne.s32.totalorder %s50, %s64
    %p66 = scmp.eq.s32.totalorder %s19, 0
    %p67 = por %p65, %p66
    %s69 = sadd.s32 %s68, 1
    %p72 = scmp.eq.s32.totalorder %s13, 1
    %p73 = scmp.ne.s32.totalorder %s68, %s70
    %p74 = scmp.eq.s32.totalorder %s13, 0
    %p75 = por %p73, %p74
    %p76 = scmp.ne.s32.totalorder %s68, %s70
    %p77 = scmp.eq.s32.totalorder %s18, 1
    %p78 = por %p76, %p77
    %p79 = scmp.ne.s32.totalorder %s70, %s71
    %p80 = scmp.eq.s32.totalorder %s18, 0
    %p81 = por %p79, %p80
    %p82 = scmp.ne.s32.totalorder %s70, %s71
    %p83 = scmp.eq.s32.totalorder %s19, 1
    %p84 = por %p82, %p83
    %p86 = scmp.ne.s32.totalorder %s71, %s85
    %p87 = scmp.eq.s32.totalorder %s19, 0
    %p88 = por %p86, %p87
    %s90 = sadd.s32 %s89, 1
    %p93 = scmp.eq.s32.totalorder %s13, 1
    %p94 = scmp.ne.s32.totalorder %s89, %s91
    %p95 = scmp.eq.s32.totalorder %s13, 0
    %p96 = por %p94, %p95
    %p97 = scmp.ne.s32.totalorder %s89, %s91
    %p98 = scmp.eq.s32.totalorder %s18, 1
    %p99 = por %p97, %p98
    %p100 = scmp.ne.s32.totalorder %s91, %s92
    %p101 = scmp.eq.s32.totalorder %s18, 0
    %p102 = por %p100, %p101
    %p103 = scmp.ne.s32.totalorder %s91, %s92
    %p104 = scmp.eq.s32.totalorder %s19, 1
    %p105 = por %p103, %p104
    %p107 = scmp.ne.s32.totalorder %s92, %s106
    %p108 = scmp.eq.s32.totalorder %s19, 0
    %p109 = por %p107, %p108
    %s111 = sadd.s32 %s110, 1
    %p114 = scmp.eq.s32.totalorder %s13, 1
    %p115 = scmp.ne.s32.totalorder %s110, %s112
    %p116 = scmp.eq.s32.totalorder %s13, 0
    %p117 = por %p115, %p116
    %p118 = scmp.ne.s32.totalorder %s110, %s112
    %p119 = scmp.eq.s32.totalorder %s18, 1
    %p120 = por %p118, %p119
    %p121 = scmp.ne.s32.totalorder %s112, %s113
    %p122 = scmp.eq.s32.totalorder %s18, 0
    %p123 = por %p121, %p122
    %p124 = scmp.ne.s32.totalorder %s112, %s113
    %p125 = scmp.eq.s32.totalorder %s19, 1
    %p126 = por %p124, %p125
    %p128 = scmp.ne.s32.totalorder %s113, %s127
    %p129 = scmp.eq.s32.totalorder %s19, 0
    %p130 = por %p128, %p129
    %s132 = sadd.s32 %s131, 1
    %p135 = scmp.eq.s32.totalorder %s13, 1
    %p136 = scmp.ne.s32.totalorder %s131, %s133
    %p137 = scmp.eq.s32.totalorder %s13, 0
    %p138 = por %p136, %p137
    %p139 = scmp.ne.s32.totalorder %s131, %s133
    %p140 = scmp.eq.s32.totalorder %s18, 1
    %p141 = por %p139, %p140
    %p142 = scmp.ne.s32.totalorder %s133, %s134
    %p143 = scmp.eq.s32.totalorder %s18, 0
    %p144 = por %p142, %p143
    %p145 = scmp.ne.s32.totalorder %s133, %s134
    %p146 = scmp.eq.s32.totalorder %s19, 1
    %p147 = por %p145, %p146
    %p149 = scmp.ne.s32.totalorder %s134, %s148
    %p150 = scmp.eq.s32.totalorder %s19, 0
    %p151 = por %p149, %p150
    %s153 = sadd.s32 %s152, 1
    %p156 = scmp.eq.s32.totalorder %s13, 1
    %p157 = scmp.ne.s32.totalorder %s152, %s154
    %p158 = scmp.eq.s32.totalorder %s13, 0
    %p159 = por %p157, %p158
    %p160 = scmp.ne.s32.totalorder %s152, %s154
    %p161 = scmp.eq.s32.totalorder %s18, 1
    %p162 = por %p160, %p161
    %p163 = scmp.ne.s32.totalorder %s154, %s155
    %p164 = scmp.eq.s32.totalorder %s18, 0
    %p165 = por %p163, %p164
    %p166 = scmp.ne.s32.totalorder %s154, %s155
    %p167 = scmp.eq.s32.totalorder %s19, 1
    %p168 = por %p166, %p167
    %p170 = scmp.ne.s32.totalorder %s155, %s169
    %p171 = scmp.eq.s32.totalorder %s19, 0
    %p172 = por %p170, %p171
    %s173 = ssub.s32 %s13, %s20
    %p174 = scmp.eq.s32.totalorder %s173, 0
    %s176 = sadd.s32 %s175, 1
    %s177 = scalar_select %p174, %s175, %s176
    %p180 = pneg %p174
    %p181 = scmp.eq.s32.totalorder %s13, 1
    %p182 = por %p180, %p181
    %p183 = scmp.ne.s32.totalorder %s175, %s178
    %p184 = scmp.eq.s32.totalorder %s13, 0
    %p185 = por %p183, %p184
    %p186 = scmp.ne.s32.totalorder %s175, %s178
    %p187 = scmp.eq.s32.totalorder %s18, 1
    %p188 = por %p186, %p187
    %p189 = scmp.ne.s32.totalorder %s178, %s179
    %p190 = scmp.eq.s32.totalorder %s18, 0
    %p191 = por %p189, %p190
    %p192 = scmp.ne.s32.totalorder %s178, %s179
    %p193 = scmp.eq.s32.totalorder %s19, 1
    %p194 = por %p192, %p193
    %p196 = scmp.ne.s32.totalorder %s179, %s195
    %p197 = scmp.eq.s32.totalorder %s19, 0
    %p198 = por %p196, %p197
    %p199 = scmp.le.s32.totalorder 1, %s13
    %p200 = scmp.lt.s32.totalorder %s13, 3
    %p201 = pnand %p199, %p200
    %p202 = pneg %p201
    // Predicated region
    $region9: #{actor_forward.2} parent=5 // pred_check
      _
    $region10: #{actor_forward.2} parent=5 // pred_check_branch
      %204 = sbr.rel (%p201) target = $region12
    $region11: #{actor_forward.2} parent=5 // pred_region
      %s205 = ssub.s32 %s13, 1
      // Predicated region
      $region13: #{actor_forward.2} parent=11 // pred_check
        %p206 = pneg %p60
      $region14: #{actor_forward.2} parent=11 // pred_check_branch
        %208 = sbr.rel (%p206) target = $region16
      $region15: #{actor_forward.2} parent=11 // pred_region
        _
      $region16: #{actor_forward.2} parent=11 // pred_fallthru
        _
      // Predicated region
      $region17: #{actor_forward.2} parent=11 // pred_check
        %p209 = pneg %p81
      $region18: #{actor_forward.2} parent=11 // pred_check_branch
        %211 = sbr.rel (%p209) target = $region20
      $region19: #{actor_forward.2} parent=11 // pred_region
        _
      $region20: #{actor_forward.2} parent=11 // pred_fallthru
        _
      // Predicated region
      $region21: #{actor_forward.2} parent=11 // pred_check
        %p212 = pneg %p102
      $region22: #{actor_forward.2} parent=11 // pred_check_branch
        %214 = sbr.rel (%p212) target = $region24
      $region23: #{actor_forward.2} parent=11 // pred_region
        _
      $region24: #{actor_forward.2} parent=11 // pred_fallthru
        _
      // Predicated region
      $region25: #{actor_forward.2} parent=11 // pred_check
        %p215 = pneg %p123
      $region26: #{actor_forward.2} parent=11 // pred_check_branch
        %217 = sbr.rel (%p215) target = $region28
      $region27: #{actor_forward.2} parent=11 // pred_region
        _
      $region28: #{actor_forward.2} parent=11 // pred_fallthru
        _
      // Predicated region
      $region29: #{actor_forward.2} parent=11 // pred_check
        %p218 = pneg %p144
      $region30: #{actor_forward.2} parent=11 // pred_check_branch
        %220 = sbr.rel (%p218) target = $region32
      $region31: #{actor_forward.2} parent=11 // pred_region
        _
      $region32: #{actor_forward.2} parent=11 // pred_fallthru
        _
      // Predicated region
      $region33: #{actor_forward.2} parent=11 // pred_check
        %p221 = pneg %p165
      $region34: #{actor_forward.2} parent=11 // pred_check_branch
        %223 = sbr.rel (%p221) target = $region36
      $region35: #{actor_forward.2} parent=11 // pred_region
        _
      $region36: #{actor_forward.2} parent=11 // pred_fallthru
        _
    $region12: #{actor_forward.2} parent=5 // pred_fallthru
      _
    %p224 = scmp.lt.s32.totalorder %s13, 2
    // Predicated region
    $region37: #{actor_forward.2} parent=5 // pred_check
      %p225 = pneg %p224
    $region38: #{actor_forward.2} parent=5 // pred_check_branch
      %227 = sbr.rel (%p225) target = $region40
    $region39: #{actor_forward.2} parent=5 // pred_region
      // Predicated region
      $region41: #{actor_forward.2} parent=39 // pred_check
        %p228 = pneg %p33
      $region42: #{actor_forward.2} parent=39 // pred_check_branch
        %230 = sbr.rel (%p228) target = $region44
      $region43: #{actor_forward.2} parent=39 // pred_region
        %s231 = smul.u32 32, %s13
        %p232 = scmp.lt.s32.totalorder %s231, 63
        %s233 = scalar_select %p232, %s231, 63
        %s234 = smul.addr %s233, 8
        %s235 = scalar_lea.vmem %s0, %s234
        %s236 = smul.u32 32, %s13
      $region44: #{actor_forward.2} parent=39 // pred_fallthru
        _
    $region40: #{actor_forward.2} parent=5 // pred_fallthru
      _
    %p237 = scmp.le.s32.totalorder 1, %s13
    %p238 = scmp.lt.s32.totalorder %s13, 3
    %p239 = pnand %p237, %p238
    %p240 = pneg %p239
    // Predicated region
    $region45: #{actor_forward.2} parent=5 // pred_check
      _
    $region46: #{actor_forward.2} parent=5 // pred_check_branch
      %242 = sbr.rel (%p239) target = $region48
    $region47: #{actor_forward.2} parent=5 // pred_region
      %s243 = ssub.s32 %s13, 1
      %s244 = smul.u32 32, %s18
      %p245 = scmp.lt.s32.totalorder %s244, 63
      %s246 = scalar_select %p245, %s244, 63
      %s247 = smul.addr %s246, 8
      %s248 = scalar_lea.vmem %s0, %s247
      %p249 = pneg %p39
      %p250 = pneg %p36
      %p251 = pneg %p60
      %p252 = pneg %p57
      %p253 = pneg %p81
      %p254 = pneg %p78
      %p255 = pneg %p102
      %p256 = pneg %p99
      %p257 = pneg %p123
      %p258 = pneg %p120
      %p259 = pneg %p144
      %p260 = pneg %p141
      %p261 = pneg %p165
      %p262 = pneg %p162
      %p263 = pneg %p191
      %p264 = pneg %p188
      %s265 = smul.u32 32, %s18
      %p266 = scmp.lt.s32.totalorder %s265, 63
      %s267 = scalar_select %p266, %s265, 63
      %s268 = smul.addr %s267, 8
      %s269 = scalar_lea.vmem %s7, %s268
      %s270 = smul.u32 32, %s18
      %p271 = scmp.lt.s32.totalorder %s270, 63
      %s272 = scalar_select %p271, %s270, 63
      %s273 = smul.addr %s272, 8
      %s274 = scalar_lea.vmem %s0, %s273
      %s275 = smul.u32 32, %s18
      %s276 = smul.u32 32, %s18
      %p277 = scmp.lt.s32.totalorder %s276, 63
      %s278 = scalar_select %p277, %s276, 63
      %s279 = smul.addr %s278, 8
      %s280 = scalar_lea.vmem %s7, %s279
      %s281 = smul.u32 32, %s18
      %v282 = vld [vmem:[%s274] sm:$0xff]
      %v283 = vld [vmem:[%s274 + $0x8] sm:$0xff]
      %v284 = vld [vmem:[%s274 + $0x10] sm:$0xff]
      %v285 = vld [vmem:[%s274 + $0x18] sm:$0xff]
      %v286 = vld [vmem:[%s274 + $0x20] sm:$0xff]
      %v287 = vld [vmem:[%s274 + $0x28] sm:$0xff]
      %v288 = vld [vmem:[%s274 + $0x30] sm:$0xff]
      %v289 = vld [vmem:[%s274 + $0x38] sm:$0xff]
      %v290 = vld [vmem:[%s274 + $0x40] sm:$0xff]
      %v291 = vld [vmem:[%s274 + $0x48] sm:$0xff]
      %v292 = vld [vmem:[%s274 + $0x50] sm:$0xff]
      %v293 = vld [vmem:[%s274 + $0x58] sm:$0xff]
      %v294 = vld [vmem:[%s274 + $0x60] sm:$0xff]
      %v295 = vld [vmem:[%s274 + $0x68] sm:$0xff]
      %v296 = vld [vmem:[%s274 + $0x70] sm:$0xff]
      %v297 = vld [vmem:[%s274 + $0x78] sm:$0xff]
      %v298 = vld [vmem:[%s274 + $0x80] sm:$0xff]
      %v299 = vld [vmem:[%s274 + $0x88] sm:$0xff]
      %v300 = vld [vmem:[%s274 + $0x90] sm:$0xff]
      %v301 = vld [vmem:[%s274 + $0x98] sm:$0xff]
      %v302 = vld [vmem:[%s274 + $0xa0] sm:$0xff]
      %v303 = vld [vmem:[%s274 + $0xa8] sm:$0xff]
      %v304 = vld [vmem:[%s274 + $0xb0] sm:$0xff]
      %v305 = vld [vmem:[%s274 + $0xb8] sm:$0xff]
      %v306 = vld [vmem:[%s274 + $0xc0] sm:$0xff]
      %v307 = vld [vmem:[%s274 + $0xc8] sm:$0xff]
      %v308 = vld [vmem:[%s274 + $0xd0] sm:$0xff]
      %v309 = vld [vmem:[%s274 + $0xd8] sm:$0xff]
      %v310 = vld [vmem:[%s274 + $0xe0] sm:$0xff]
      %v311 = vld [vmem:[%s274 + $0xe8] sm:$0xff]
      %v312 = vld [vmem:[%s274 + $0xf0] sm:$0xff]
      %v313 = vld [vmem:[%s274 + $0xf8] sm:$0xff]
      %v314 = vld [vmem:[%s1] sm:$0xf]
      %316 = vset.pattern.permute.xlu0 0
      %317 = vperm.xlu0 %316, %v282
      %v318 = vpop.permute.xlu0 %317
      %321 = vset.pattern.permute.xlu0 0
      %322 = vperm.xlu0 %321, %v283
      %v323 = vpop.permute.xlu0 %322
      %326 = vset.pattern.permute.xlu0 0
      %327 = vperm.xlu0 %326, %v284
      %v328 = vpop.permute.xlu0 %327
      %331 = vset.pattern.permute.xlu0 0
      %332 = vperm.xlu0 %331, %v285
      %v333 = vpop.permute.xlu0 %332
      %336 = vset.pattern.permute.xlu0 0
      %337 = vperm.xlu0 %336, %v286
      %v338 = vpop.permute.xlu0 %337
      %341 = vset.pattern.permute.xlu0 0
      %342 = vperm.xlu0 %341, %v287
      %v343 = vpop.permute.xlu0 %342
      %346 = vset.pattern.permute.xlu0 0
      %347 = vperm.xlu0 %346, %v288
      %v348 = vpop.permute.xlu0 %347
      %351 = vset.pattern.permute.xlu0 0
      %352 = vperm.xlu0 %351, %v289
      %v353 = vpop.permute.xlu0 %352
      %356 = vset.pattern.permute.xlu0 0
      %357 = vperm.xlu0 %356, %v290
      %v358 = vpop.permute.xlu0 %357
      %361 = vset.pattern.permute.xlu0 0
      %362 = vperm.xlu0 %361, %v291
      %v363 = vpop.permute.xlu0 %362
      %366 = vset.pattern.permute.xlu0 0
      %367 = vperm.xlu0 %366, %v292
      %v368 = vpop.permute.xlu0 %367
      %371 = vset.pattern.permute.xlu0 0
      %372 = vperm.xlu0 %371, %v293
      %v373 = vpop.permute.xlu0 %372
      %376 = vset.pattern.permute.xlu0 0
      %377 = vperm.xlu0 %376, %v294
      %v378 = vpop.permute.xlu0 %377
      %381 = vset.pattern.permute.xlu0 0
      %382 = vperm.xlu0 %381, %v295
      %v383 = vpop.permute.xlu0 %382
      %386 = vset.pattern.permute.xlu0 0
      %387 = vperm.xlu0 %386, %v296
      %v388 = vpop.permute.xlu0 %387
      %391 = vset.pattern.permute.xlu0 0
      %392 = vperm.xlu0 %391, %v297
      %v393 = vpop.permute.xlu0 %392
      %396 = vset.pattern.permute.xlu0 0
      %397 = vperm.xlu0 %396, %v298
      %v398 = vpop.permute.xlu0 %397
      %401 = vset.pattern.permute.xlu0 0
      %402 = vperm.xlu0 %401, %v299
      %v403 = vpop.permute.xlu0 %402
      %406 = vset.pattern.permute.xlu0 0
      %407 = vperm.xlu0 %406, %v300
      %v408 = vpop.permute.xlu0 %407
      %411 = vset.pattern.permute.xlu0 0
      %412 = vperm.xlu0 %411, %v301
      %v413 = vpop.permute.xlu0 %412
      %416 = vset.pattern.permute.xlu0 0
      %417 = vperm.xlu0 %416, %v302
      %v418 = vpop.permute.xlu0 %417
      %421 = vset.pattern.permute.xlu0 0
      %422 = vperm.xlu0 %421, %v303
      %v423 = vpop.permute.xlu0 %422
      %426 = vset.pattern.permute.xlu0 0
      %427 = vperm.xlu0 %426, %v304
      %v428 = vpop.permute.xlu0 %427
      %431 = vset.pattern.permute.xlu0 0
      %432 = vperm.xlu0 %431, %v305
      %v433 = vpop.permute.xlu0 %432
      %436 = vset.pattern.permute.xlu0 0
      %437 = vperm.xlu0 %436, %v306
      %v438 = vpop.permute.xlu0 %437
      %441 = vset.pattern.permute.xlu0 0
      %442 = vperm.xlu0 %441, %v307
      %v443 = vpop.permute.xlu0 %442
      %446 = vset.pattern.permute.xlu0 0
      %447 = vperm.xlu0 %446, %v308
      %v448 = vpop.permute.xlu0 %447
      %451 = vset.pattern.permute.xlu0 0
      %452 = vperm.xlu0 %451, %v309
      %v453 = vpop.permute.xlu0 %452
      %456 = vset.pattern.permute.xlu0 0
      %457 = vperm.xlu0 %456, %v310
      %v458 = vpop.permute.xlu0 %457
      %461 = vset.pattern.permute.xlu0 0
      %462 = vperm.xlu0 %461, %v311
      %v463 = vpop.permute.xlu0 %462
      %466 = vset.pattern.permute.xlu0 0
      %467 = vperm.xlu0 %466, %v312
      %v468 = vpop.permute.xlu0 %467
      %471 = vset.pattern.permute.xlu0 0
      %472 = vperm.xlu0 %471, %v313
      %v473 = vpop.permute.xlu0 %472
      %v475 = vlaneseq
      %v476 = vshrl.u32 %v475, 7
      %v477 = vsub.s32 0, %v476
      %v478 = vrot.slane %v314, %v477
      %v479 = vmul.f32 %v318, %v478
      %v480 = vmul.f32 %v323, %v478
      %v481 = vmul.f32 %v328, %v478
      %v482 = vmul.f32 %v333, %v478
      %v483 = vmul.f32 %v338, %v478
      %v484 = vmul.f32 %v343, %v478
      %v485 = vmul.f32 %v348, %v478
      %v486 = vmul.f32 %v353, %v478
      %v487 = vmul.f32 %v358, %v478
      %v488 = vmul.f32 %v363, %v478
      %v489 = vmul.f32 %v368, %v478
      %v490 = vmul.f32 %v373, %v478
      %v491 = vmul.f32 %v378, %v478
      %v492 = vmul.f32 %v383, %v478
      %v493 = vmul.f32 %v388, %v478
      %v494 = vmul.f32 %v393, %v478
      %v495 = vmul.f32 %v398, %v478
      %v496 = vmul.f32 %v403, %v478
      %v497 = vmul.f32 %v408, %v478
      %v498 = vmul.f32 %v413, %v478
      %v499 = vmul.f32 %v418, %v478
      %v500 = vmul.f32 %v423, %v478
      %v501 = vmul.f32 %v428, %v478
      %v502 = vmul.f32 %v433, %v478
      %v503 = vmul.f32 %v438, %v478
      %v504 = vmul.f32 %v443, %v478
      %v505 = vmul.f32 %v448, %v478
      %v506 = vmul.f32 %v453, %v478
      %v507 = vmul.f32 %v458, %v478
      %v508 = vmul.f32 %v463, %v478
      %v509 = vmul.f32 %v468, %v478
      %v510 = vmul.f32 %v473, %v478
      %511 = vset.pattern.permute.xlu0 1
      %512 = vperm.xlu0 %511, %v282
      %v513 = vpop.permute.xlu0 %512
      %515 = vset.pattern.permute.xlu0 1
      %516 = vperm.xlu0 %515, %v283
      %v517 = vpop.permute.xlu0 %516
      %519 = vset.pattern.permute.xlu0 1
      %520 = vperm.xlu0 %519, %v284
      %v521 = vpop.permute.xlu0 %520
      %523 = vset.pattern.permute.xlu0 1
      %524 = vperm.xlu0 %523, %v285
      %v525 = vpop.permute.xlu0 %524
      %527 = vset.pattern.permute.xlu0 1
      %528 = vperm.xlu0 %527, %v286
      %v529 = vpop.permute.xlu0 %528
      %531 = vset.pattern.permute.xlu0 1
      %532 = vperm.xlu0 %531, %v287
      %v533 = vpop.permute.xlu0 %532
      %535 = vset.pattern.permute.xlu0 1
      %536 = vperm.xlu0 %535, %v288
      %v537 = vpop.permute.xlu0 %536
      %539 = vset.pattern.permute.xlu0 1
      %540 = vperm.xlu0 %539, %v289
      %v541 = vpop.permute.xlu0 %540
      %543 = vset.pattern.permute.xlu0 1
      %544 = vperm.xlu0 %543, %v290
      %v545 = vpop.permute.xlu0 %544
      %547 = vset.pattern.permute.xlu0 1
      %548 = vperm.xlu0 %547, %v291
      %v549 = vpop.permute.xlu0 %548
      %551 = vset.pattern.permute.xlu0 1
      %552 = vperm.xlu0 %551, %v292
      %v553 = vpop.permute.xlu0 %552
      %555 = vset.pattern.permute.xlu0 1
      %556 = vperm.xlu0 %555, %v293
      %v557 = vpop.permute.xlu0 %556
      %559 = vset.pattern.permute.xlu0 1
      %560 = vperm.xlu0 %559, %v294
      %v561 = vpop.permute.xlu0 %560
      %563 = vset.pattern.permute.xlu0 1
      %564 = vperm.xlu0 %563, %v295
      %v565 = vpop.permute.xlu0 %564
      %567 = vset.pattern.permute.xlu0 1
      %568 = vperm.xlu0 %567, %v296
      %v569 = vpop.permute.xlu0 %568
      %571 = vset.pattern.permute.xlu0 1
      %572 = vperm.xlu0 %571, %v297
      %v573 = vpop.permute.xlu0 %572
      %575 = vset.pattern.permute.xlu0 1
      %576 = vperm.xlu0 %575, %v298
      %v577 = vpop.permute.xlu0 %576
      %579 = vset.pattern.permute.xlu0 1
      %580 = vperm.xlu0 %579, %v299
      %v581 = vpop.permute.xlu0 %580
      %583 = vset.pattern.permute.xlu0 1
      %584 = vperm.xlu0 %583, %v300
      %v585 = vpop.permute.xlu0 %584
      %587 = vset.pattern.permute.xlu0 1
      %588 = vperm.xlu0 %587, %v301
      %v589 = vpop.permute.xlu0 %588
      %591 = vset.pattern.permute.xlu0 1
      %592 = vperm.xlu0 %591, %v302
      %v593 = vpop.permute.xlu0 %592
      %595 = vset.pattern.permute.xlu0 1
      %596 = vperm.xlu0 %595, %v303
      %v597 = vpop.permute.xlu0 %596
      %599 = vset.pattern.permute.xlu0 1
      %600 = vperm.xlu0 %599, %v304
      %v601 = vpop.permute.xlu0 %600
      %603 = vset.pattern.permute.xlu0 1
      %604 = vperm.xlu0 %603, %v305
      %v605 = vpop.permute.xlu0 %604
      %607 = vset.pattern.permute.xlu0 1
      %608 = vperm.xlu0 %607, %v306
      %v609 = vpop.permute.xlu0 %608
      %611 = vset.pattern.permute.xlu0 1
      %612 = vperm.xlu0 %611, %v307
      %v613 = vpop.permute.xlu0 %612
      %615 = vset.pattern.permute.xlu0 1
      %616 = vperm.xlu0 %615, %v308
      %v617 = vpop.permute.xlu0 %616
      %619 = vset.pattern.permute.xlu0 1
      %620 = vperm.xlu0 %619, %v309
      %v621 = vpop.permute.xlu0 %620
      %623 = vset.pattern.permute.xlu0 1
      %624 = vperm.xlu0 %623, %v310
      %v625 = vpop.permute.xlu0 %624
      %627 = vset.pattern.permute.xlu0 1
      %628 = vperm.xlu0 %627, %v311
      %v629 = vpop.permute.xlu0 %628
      %631 = vset.pattern.permute.xlu0 1
      %632 = vperm.xlu0 %631, %v312
      %v633 = vpop.permute.xlu0 %632
      %635 = vset.pattern.permute.xlu0 1
      %636 = vperm.xlu0 %635, %v313
      %v637 = vpop.permute.xlu0 %636
      %v639 = vlaneseq
      %v640 = vshrl.u32 %v639, 7
      %v641 = vsub.s32 1, %v640
      %v642 = vrot.slane %v314, %v641
      %v643 = vmul.f32 %v513, %v642
      %v644 = vmul.f32 %v517, %v642
      %v645 = vmul.f32 %v521, %v642
      %v646 = vmul.f32 %v525, %v642
      %v647 = vmul.f32 %v529, %v642
      %v648 = vmul.f32 %v533, %v642
      %v649 = vmul.f32 %v537, %v642
      %v650 = vmul.f32 %v541, %v642
      %v651 = vmul.f32 %v545, %v642
      %v652 = vmul.f32 %v549, %v642
      %v653 = vmul.f32 %v553, %v642
      %v654 = vmul.f32 %v557, %v642
      %v655 = vmul.f32 %v561, %v642
      %v656 = vmul.f32 %v565, %v642
      %v657 = vmul.f32 %v569, %v642
      %v658 = vmul.f32 %v573, %v642
      %v659 = vmul.f32 %v577, %v642
      %v660 = vmul.f32 %v581, %v642
      %v661 = vmul.f32 %v585, %v642
      %v662 = vmul.f32 %v589, %v642
      %v663 = vmul.f32 %v593, %v642
      %v664 = vmul.f32 %v597, %v642
      %v665 = vmul.f32 %v601, %v642
      %v666 = vmul.f32 %v605, %v642
      %v667 = vmul.f32 %v609, %v642
      %v668 = vmul.f32 %v613, %v642
      %v669 = vmul.f32 %v617, %v642
      %v670 = vmul.f32 %v621, %v642
      %v671 = vmul.f32 %v625, %v642
      %v672 = vmul.f32 %v629, %v642
      %v673 = vmul.f32 %v633, %v642
      %v674 = vmul.f32 %v637, %v642
      %v675 = vadd.f32 %v479, %v643
      %v676 = vadd.f32 %v480, %v644
      %v677 = vadd.f32 %v481, %v645
      %v678 = vadd.f32 %v482, %v646
      %v679 = vadd.f32 %v483, %v647
      %v680 = vadd.f32 %v484, %v648
      %v681 = vadd.f32 %v485, %v649
      %v682 = vadd.f32 %v486, %v650
      %v683 = vadd.f32 %v487, %v651
      %v684 = vadd.f32 %v488, %v652
      %v685 = vadd.f32 %v489, %v653
      %v686 = vadd.f32 %v490, %v654
      %v687 = vadd.f32 %v491, %v655
      %v688 = vadd.f32 %v492, %v656
      %v689 = vadd.f32 %v493, %v657
      %v690 = vadd.f32 %v494, %v658
      %v691 = vadd.f32 %v495, %v659
      %v692 = vadd.f32 %v496, %v660
      %v693 = vadd.f32 %v497, %v661
      %v694 = vadd.f32 %v498, %v662
      %v695 = vadd.f32 %v499, %v663
      %v696 = vadd.f32 %v500, %v664
      %v697 = vadd.f32 %v501, %v665
      %v698 = vadd.f32 %v502, %v666
      %v699 = vadd.f32 %v503, %v667
      %v700 = vadd.f32 %v504, %v668
      %v701 = vadd.f32 %v505, %v669
      %v702 = vadd.f32 %v506, %v670
      %v703 = vadd.f32 %v507, %v671
      %v704 = vadd.f32 %v508, %v672
      %v705 = vadd.f32 %v509, %v673
      %v706 = vadd.f32 %v510, %v674
      %707 = vset.pattern.permute.xlu0 2
      %708 = vperm.xlu0 %707, %v282
      %v709 = vpop.permute.xlu0 %708
      %711 = vset.pattern.permute.xlu0 2
      %712 = vperm.xlu0 %711, %v283
      %v713 = vpop.permute.xlu0 %712
      %715 = vset.pattern.permute.xlu0 2
      %716 = vperm.xlu0 %715, %v284
      %v717 = vpop.permute.xlu0 %716
      %719 = vset.pattern.permute.xlu0 2
      %720 = vperm.xlu0 %719, %v285
      %v721 = vpop.permute.xlu0 %720
      %723 = vset.pattern.permute.xlu0 2
      %724 = vperm.xlu0 %723, %v286
      %v725 = vpop.permute.xlu0 %724
      %727 = vset.pattern.permute.xlu0 2
      %728 = vperm.xlu0 %727, %v287
      %v729 = vpop.permute.xlu0 %728
      %731 = vset.pattern.permute.xlu0 2
      %732 = vperm.xlu0 %731, %v288
      %v733 = vpop.permute.xlu0 %732
      %735 = vset.pattern.permute.xlu0 2
      %736 = vperm.xlu0 %735, %v289
      %v737 = vpop.permute.xlu0 %736
      %739 = vset.pattern.permute.xlu0 2
      %740 = vperm.xlu0 %739, %v290
      %v741 = vpop.permute.xlu0 %740
      %743 = vset.pattern.permute.xlu0 2
      %744 = vperm.xlu0 %743, %v291
      %v745 = vpop.permute.xlu0 %744
      %747 = vset.pattern.permute.xlu0 2
      %748 = vperm.xlu0 %747, %v292
      %v749 = vpop.permute.xlu0 %748
      %751 = vset.pattern.permute.xlu0 2
      %752 = vperm.xlu0 %751, %v293
      %v753 = vpop.permute.xlu0 %752
      %755 = vset.pattern.permute.xlu0 2
      %756 = vperm.xlu0 %755, %v294
      %v757 = vpop.permute.xlu0 %756
      %759 = vset.pattern.permute.xlu0 2
      %760 = vperm.xlu0 %759, %v295
      %v761 = vpop.permute.xlu0 %760
      %763 = vset.pattern.permute.xlu0 2
      %764 = vperm.xlu0 %763, %v296
      %v765 = vpop.permute.xlu0 %764
      %767 = vset.pattern.permute.xlu0 2
      %768 = vperm.xlu0 %767, %v297
      %v769 = vpop.permute.xlu0 %768
      %771 = vset.pattern.permute.xlu0 2
      %772 = vperm.xlu0 %771, %v298
      %v773 = vpop.permute.xlu0 %772
      %775 = vset.pattern.permute.xlu0 2
      %776 = vperm.xlu0 %775, %v299
      %v777 = vpop.permute.xlu0 %776
      %779 = vset.pattern.permute.xlu0 2
      %780 = vperm.xlu0 %779, %v300
      %v781 = vpop.permute.xlu0 %780
      %783 = vset.pattern.permute.xlu0 2
      %784 = vperm.xlu0 %783, %v301
      %v785 = vpop.permute.xlu0 %784
      %787 = vset.pattern.permute.xlu0 2
      %788 = vperm.xlu0 %787, %v302
      %v789 = vpop.permute.xlu0 %788
      %791 = vset.pattern.permute.xlu0 2
      %792 = vperm.xlu0 %791, %v303
      %v793 = vpop.permute.xlu0 %792
      %795 = vset.pattern.permute.xlu0 2
      %796 = vperm.xlu0 %795, %v304
      %v797 = vpop.permute.xlu0 %796
      %799 = vset.pattern.permute.xlu0 2
      %800 = vperm.xlu0 %799, %v305
      %v801 = vpop.permute.xlu0 %800
      %803 = vset.pattern.permute.xlu0 2
      %804 = vperm.xlu0 %803, %v306
      %v805 = vpop.permute.xlu0 %804
      %807 = vset.pattern.permute.xlu0 2
      %808 = vperm.xlu0 %807, %v307
      %v809 = vpop.permute.xlu0 %808
      %811 = vset.pattern.permute.xlu0 2
      %812 = vperm.xlu0 %811, %v308
      %v813 = vpop.permute.xlu0 %812
      %815 = vset.pattern.permute.xlu0 2
      %816 = vperm.xlu0 %815, %v309
      %v817 = vpop.permute.xlu0 %816
      %819 = vset.pattern.permute.xlu0 2
      %820 = vperm.xlu0 %819, %v310
      %v821 = vpop.permute.xlu0 %820
      %823 = vset.pattern.permute.xlu0 2
      %824 = vperm.xlu0 %823, %v311
      %v825 = vpop.permute.xlu0 %824
      %827 = vset.pattern.permute.xlu0 2
      %828 = vperm.xlu0 %827, %v312
      %v829 = vpop.permute.xlu0 %828
      %831 = vset.pattern.permute.xlu0 2
      %832 = vperm.xlu0 %831, %v313
      %v833 = vpop.permute.xlu0 %832
      %v835 = vlaneseq
      %v836 = vshrl.u32 %v835, 7
      %v837 = vsub.s32 2, %v836
      %v838 = vrot.slane %v314, %v837
      %v839 = vmul.f32 %v709, %v838
      %v840 = vmul.f32 %v713, %v838
      %v841 = vmul.f32 %v717, %v838
      %v842 = vmul.f32 %v721, %v838
      %v843 = vmul.f32 %v725, %v838
      %v844 = vmul.f32 %v729, %v838
      %v845 = vmul.f32 %v733, %v838
      %v846 = vmul.f32 %v737, %v838
      %v847 = vmul.f32 %v741, %v838
      %v848 = vmul.f32 %v745, %v838
      %v849 = vmul.f32 %v749, %v838
      %v850 = vmul.f32 %v753, %v838
      %v851 = vmul.f32 %v757, %v838
      %v852 = vmul.f32 %v761, %v838
      %v853 = vmul.f32 %v765, %v838
      %v854 = vmul.f32 %v769, %v838
      %v855 = vmul.f32 %v773, %v838
      %v856 = vmul.f32 %v777, %v838
      %v857 = vmul.f32 %v781, %v838
      %v858 = vmul.f32 %v785, %v838
      %v859 = vmul.f32 %v789, %v838
      %v860 = vmul.f32 %v793, %v838
      %v861 = vmul.f32 %v797, %v838
      %v862 = vmul.f32 %v801, %v838
      %v863 = vmul.f32 %v805, %v838
      %v864 = vmul.f32 %v809, %v838
      %v865 = vmul.f32 %v813, %v838
      %v866 = vmul.f32 %v817, %v838
      %v867 = vmul.f32 %v821, %v838
      %v868 = vmul.f32 %v825, %v838
      %v869 = vmul.f32 %v829, %v838
      %v870 = vmul.f32 %v833, %v838
      %v871 = vadd.f32 %v675, %v839
      %v872 = vadd.f32 %v676, %v840
      %v873 = vadd.f32 %v677, %v841
      %v874 = vadd.f32 %v678, %v842
      %v875 = vadd.f32 %v679, %v843
      %v876 = vadd.f32 %v680, %v844
      %v877 = vadd.f32 %v681, %v845
      %v878 = vadd.f32 %v682, %v846
      %v879 = vadd.f32 %v683, %v847
      %v880 = vadd.f32 %v684, %v848
      %v881 = vadd.f32 %v685, %v849
      %v882 = vadd.f32 %v686, %v850
      %v883 = vadd.f32 %v687, %v851
      %v884 = vadd.f32 %v688, %v852
      %v885 = vadd.f32 %v689, %v853
      %v886 = vadd.f32 %v690, %v854
      %v887 = vadd.f32 %v691, %v855
      %v888 = vadd.f32 %v692, %v856
      %v889 = vadd.f32 %v693, %v857
      %v890 = vadd.f32 %v694, %v858
      %v891 = vadd.f32 %v695, %v859
      %v892 = vadd.f32 %v696, %v860
      %v893 = vadd.f32 %v697, %v861
      %v894 = vadd.f32 %v698, %v862
      %v895 = vadd.f32 %v699, %v863
      %v896 = vadd.f32 %v700, %v864
      %v897 = vadd.f32 %v701, %v865
      %v898 = vadd.f32 %v702, %v866
      %v899 = vadd.f32 %v703, %v867
      %v900 = vadd.f32 %v704, %v868
      %v901 = vadd.f32 %v705, %v869
      %v902 = vadd.f32 %v706, %v870
      %903 = vset.pattern.permute.xlu0 3
      %904 = vperm.xlu0 %903, %v282
      %v905 = vpop.permute.xlu0 %904
      %907 = vset.pattern.permute.xlu0 3
      %908 = vperm.xlu0 %907, %v283
      %v909 = vpop.permute.xlu0 %908
      %911 = vset.pattern.permute.xlu0 3
      %912 = vperm.xlu0 %911, %v284
      %v913 = vpop.permute.xlu0 %912
      %915 = vset.pattern.permute.xlu0 3
      %916 = vperm.xlu0 %915, %v285
      %v917 = vpop.permute.xlu0 %916
      %919 = vset.pattern.permute.xlu0 3
      %920 = vperm.xlu0 %919, %v286
      %v921 = vpop.permute.xlu0 %920
      %923 = vset.pattern.permute.xlu0 3
      %924 = vperm.xlu0 %923, %v287
      %v925 = vpop.permute.xlu0 %924
      %927 = vset.pattern.permute.xlu0 3
      %928 = vperm.xlu0 %927, %v288
      %v929 = vpop.permute.xlu0 %928
      %931 = vset.pattern.permute.xlu0 3
      %932 = vperm.xlu0 %931, %v289
      %v933 = vpop.permute.xlu0 %932
      %935 = vset.pattern.permute.xlu0 3
      %936 = vperm.xlu0 %935, %v290
      %v937 = vpop.permute.xlu0 %936
      %939 = vset.pattern.permute.xlu0 3
      %940 = vperm.xlu0 %939, %v291
      %v941 = vpop.permute.xlu0 %940
      %943 = vset.pattern.permute.xlu0 3
      %944 = vperm.xlu0 %943, %v292
      %v945 = vpop.permute.xlu0 %944
      %947 = vset.pattern.permute.xlu0 3
      %948 = vperm.xlu0 %947, %v293
      %v949 = vpop.permute.xlu0 %948
      %951 = vset.pattern.permute.xlu0 3
      %952 = vperm.xlu0 %951, %v294
      %v953 = vpop.permute.xlu0 %952
      %955 = vset.pattern.permute.xlu0 3
      %956 = vperm.xlu0 %955, %v295
      %v957 = vpop.permute.xlu0 %956
      %959 = vset.pattern.permute.xlu0 3
      %960 = vperm.xlu0 %959, %v296
      %v961 = vpop.permute.xlu0 %960
      %963 = vset.pattern.permute.xlu0 3
      %964 = vperm.xlu0 %963, %v297
      %v965 = vpop.permute.xlu0 %964
      %967 = vset.pattern.permute.xlu0 3
      %968 = vperm.xlu0 %967, %v298
      %v969 = vpop.permute.xlu0 %968
      %971 = vset.pattern.permute.xlu0 3
      %972 = vperm.xlu0 %971, %v299
      %v973 = vpop.permute.xlu0 %972
      %975 = vset.pattern.permute.xlu0 3
      %976 = vperm.xlu0 %975, %v300
      %v977 = vpop.permute.xlu0 %976
      %979 = vset.pattern.permute.xlu0 3
      %980 = vperm.xlu0 %979, %v301
      %v981 = vpop.permute.xlu0 %980
      %983 = vset.pattern.permute.xlu0 3
      %984 = vperm.xlu0 %983, %v302
      %v985 = vpop.permute.xlu0 %984
      %987 = vset.pattern.permute.xlu0 3
      %988 = vperm.xlu0 %987, %v303
      %v989 = vpop.permute.xlu0 %988
      %991 = vset.pattern.permute.xlu0 3
      %992 = vperm.xlu0 %991, %v304
      %v993 = vpop.permute.xlu0 %992
      %995 = vset.pattern.permute.xlu0 3
      %996 = vperm.xlu0 %995, %v305
      %v997 = vpop.permute.xlu0 %996
      %999 = vset.pattern.permute.xlu0 3
      %1000 = vperm.xlu0 %999, %v306
      %v1001 = vpop.permute.xlu0 %1000
      %1003 = vset.pattern.permute.xlu0 3
      %1004 = vperm.xlu0 %1003, %v307
      %v1005 = vpop.permute.xlu0 %1004
      %1007 = vset.pattern.permute.xlu0 3
      %1008 = vperm.xlu0 %1007, %v308
      %v1009 = vpop.permute.xlu0 %1008
      %1011 = vset.pattern.permute.xlu0 3
      %1012 = vperm.xlu0 %1011, %v309
      %v1013 = vpop.permute.xlu0 %1012
      %1015 = vset.pattern.permute.xlu0 3
      %1016 = vperm.xlu0 %1015, %v310
      %v1017 = vpop.permute.xlu0 %1016
      %1019 = vset.pattern.permute.xlu0 3
      %1020 = vperm.xlu0 %1019, %v311
      %v1021 = vpop.permute.xlu0 %1020
      %1023 = vset.pattern.permute.xlu0 3
      %1024 = vperm.xlu0 %1023, %v312
      %v1025 = vpop.permute.xlu0 %1024
      %1027 = vset.pattern.permute.xlu0 3
      %1028 = vperm.xlu0 %1027, %v313
      %v1029 = vpop.permute.xlu0 %1028
      %v1031 = vlaneseq
      %v1032 = vshrl.u32 %v1031, 7
      %v1033 = vsub.s32 3, %v1032
      %v1034 = vrot.slane %v314, %v1033
      %v1035 = vmul.f32 %v905, %v1034
      %v1036 = vmul.f32 %v909, %v1034
      %v1037 = vmul.f32 %v913, %v1034
      %v1038 = vmul.f32 %v917, %v1034
      %v1039 = vmul.f32 %v921, %v1034
      %v1040 = vmul.f32 %v925, %v1034
      %v1041 = vmul.f32 %v929, %v1034
      %v1042 = vmul.f32 %v933, %v1034
      %v1043 = vmul.f32 %v937, %v1034
      %v1044 = vmul.f32 %v941, %v1034
      %v1045 = vmul.f32 %v945, %v1034
      %v1046 = vmul.f32 %v949, %v1034
      %v1047 = vmul.f32 %v953, %v1034
      %v1048 = vmul.f32 %v957, %v1034
      %v1049 = vmul.f32 %v961, %v1034
      %v1050 = vmul.f32 %v965, %v1034
      %v1051 = vmul.f32 %v969, %v1034
      %v1052 = vmul.f32 %v973, %v1034
      %v1053 = vmul.f32 %v977, %v1034
      %v1054 = vmul.f32 %v981, %v1034
      %v1055 = vmul.f32 %v985, %v1034
      %v1056 = vmul.f32 %v989, %v1034
      %v1057 = vmul.f32 %v993, %v1034
      %v1058 = vmul.f32 %v997, %v1034
      %v1059 = vmul.f32 %v1001, %v1034
      %v1060 = vmul.f32 %v1005, %v1034
      %v1061 = vmul.f32 %v1009, %v1034
      %v1062 = vmul.f32 %v1013, %v1034
      %v1063 = vmul.f32 %v1017, %v1034
      %v1064 = vmul.f32 %v1021, %v1034
      %v1065 = vmul.f32 %v1025, %v1034
      %v1066 = vmul.f32 %v1029, %v1034
      %v1067 = vadd.f32 %v871, %v1035
      %v1068 = vadd.f32 %v872, %v1036
      %v1069 = vadd.f32 %v873, %v1037
      %v1070 = vadd.f32 %v874, %v1038
      %v1071 = vadd.f32 %v875, %v1039
      %v1072 = vadd.f32 %v876, %v1040
      %v1073 = vadd.f32 %v877, %v1041
      %v1074 = vadd.f32 %v878, %v1042
      %v1075 = vadd.f32 %v879, %v1043
      %v1076 = vadd.f32 %v880, %v1044
      %v1077 = vadd.f32 %v881, %v1045
      %v1078 = vadd.f32 %v882, %v1046
      %v1079 = vadd.f32 %v883, %v1047
      %v1080 = vadd.f32 %v884, %v1048
      %v1081 = vadd.f32 %v885, %v1049
      %v1082 = vadd.f32 %v886, %v1050
      %v1083 = vadd.f32 %v887, %v1051
      %v1084 = vadd.f32 %v888, %v1052
      %v1085 = vadd.f32 %v889, %v1053
      %v1086 = vadd.f32 %v890, %v1054
      %v1087 = vadd.f32 %v891, %v1055
      %v1088 = vadd.f32 %v892, %v1056
      %v1089 = vadd.f32 %v893, %v1057
      %v1090 = vadd.f32 %v894, %v1058
      %v1091 = vadd.f32 %v895, %v1059
      %v1092 = vadd.f32 %v896, %v1060
      %v1093 = vadd.f32 %v897, %v1061
      %v1094 = vadd.f32 %v898, %v1062
      %v1095 = vadd.f32 %v899, %v1063
      %v1096 = vadd.f32 %v900, %v1064
      %v1097 = vadd.f32 %v901, %v1065
      %v1098 = vadd.f32 %v902, %v1066
      %v1099 = vld [vmem:[%s2] sm:$0x1]
      %v1101 = vlaneseq
      %v1102 = vshrl.u32 %v1101, 7
      %v1103 = vsub.s32 0, %v1102
      %v1104 = vrot.slane %v1099, %v1103
      %v1106 = vadd.f32 %v1067, %v1104
      %v1107 = vadd.f32 %v1068, %v1104
      %v1108 = vadd.f32 %v1069, %v1104
      %v1109 = vadd.f32 %v1070, %v1104
      %v1110 = vadd.f32 %v1071, %v1104
      %v1111 = vadd.f32 %v1072, %v1104
      %v1112 = vadd.f32 %v1073, %v1104
      %v1113 = vadd.f32 %v1074, %v1104
      %v1114 = vadd.f32 %v1075, %v1104
      %v1115 = vadd.f32 %v1076, %v1104
      %v1116 = vadd.f32 %v1077, %v1104
      %v1117 = vadd.f32 %v1078, %v1104
      %v1118 = vadd.f32 %v1079, %v1104
      %v1119 = vadd.f32 %v1080, %v1104
      %v1120 = vadd.f32 %v1081, %v1104
      %v1121 = vadd.f32 %v1082, %v1104
      %v1122 = vadd.f32 %v1083, %v1104
      %v1123 = vadd.f32 %v1084, %v1104
      %v1124 = vadd.f32 %v1085, %v1104
      %v1125 = vadd.f32 %v1086, %v1104
      %v1126 = vadd.f32 %v1087, %v1104
      %v1127 = vadd.f32 %v1088, %v1104
      %v1128 = vadd.f32 %v1089, %v1104
      %v1129 = vadd.f32 %v1090, %v1104
      %v1130 = vadd.f32 %v1091, %v1104
      %v1131 = vadd.f32 %v1092, %v1104
      %v1132 = vadd.f32 %v1093, %v1104
      %v1133 = vadd.f32 %v1094, %v1104
      %v1134 = vadd.f32 %v1095, %v1104
      %v1135 = vadd.f32 %v1096, %v1104
      %v1136 = vadd.f32 %v1097, %v1104
      %v1137 = vadd.f32 %v1098, %v1104
      %v1138 = vmax.f32 %v1106, 0.0
      %v1139 = vmax.f32 %v1107, 0.0
      %v1140 = vmax.f32 %v1108, 0.0
      %v1141 = vmax.f32 %v1109, 0.0
      %v1142 = vmax.f32 %v1110, 0.0
      %v1143 = vmax.f32 %v1111, 0.0
      %v1144 = vmax.f32 %v1112, 0.0
      %v1145 = vmax.f32 %v1113, 0.0
      %v1146 = vmax.f32 %v1114, 0.0
      %v1147 = vmax.f32 %v1115, 0.0
      %v1148 = vmax.f32 %v1116, 0.0
      %v1149 = vmax.f32 %v1117, 0.0
      %v1150 = vmax.f32 %v1118, 0.0
      %v1151 = vmax.f32 %v1119, 0.0
      %v1152 = vmax.f32 %v1120, 0.0
      %v1153 = vmax.f32 %v1121, 0.0
      %v1154 = vmax.f32 %v1122, 0.0
      %v1155 = vmax.f32 %v1123, 0.0
      %v1156 = vmax.f32 %v1124, 0.0
      %v1157 = vmax.f32 %v1125, 0.0
      %v1158 = vmax.f32 %v1126, 0.0
      %v1159 = vmax.f32 %v1127, 0.0
      %v1160 = vmax.f32 %v1128, 0.0
      %v1161 = vmax.f32 %v1129, 0.0
      %v1162 = vmax.f32 %v1130, 0.0
      %v1163 = vmax.f32 %v1131, 0.0
      %v1164 = vmax.f32 %v1132, 0.0
      %v1165 = vmax.f32 %v1133, 0.0
      %v1166 = vmax.f32 %v1134, 0.0
      %v1167 = vmax.f32 %v1135, 0.0
      %v1168 = vmax.f32 %v1136, 0.0
      %v1169 = vmax.f32 %v1137, 0.0
      %v1170 = vld [vmem:[%s3] sm:$0xff]
      %v1171 = vld [vmem:[%s3 + $0x8] sm:$0xff]
      %v1172 = vld [vmem:[%s3 + $0x10] sm:$0xff]
      %v1173 = vld [vmem:[%s3 + $0x18] sm:$0xff]
      %v1174 = vld [vmem:[%s3 + $0x20] sm:$0xff]
      %v1175 = vld [vmem:[%s3 + $0x28] sm:$0xff]
      %v1176 = vld [vmem:[%s3 + $0x30] sm:$0xff]
      %v1177 = vld [vmem:[%s3 + $0x38] sm:$0xff]
      %v1178 = vld [vmem:[%s3 + $0x40] sm:$0xff]
      %v1179 = vld [vmem:[%s3 + $0x48] sm:$0xff]
      %v1180 = vld [vmem:[%s3 + $0x50] sm:$0xff]
      %v1181 = vld [vmem:[%s3 + $0x58] sm:$0xff]
      %v1182 = vld [vmem:[%s3 + $0x60] sm:$0xff]
      %v1183 = vld [vmem:[%s3 + $0x68] sm:$0xff]
      %v1184 = vld [vmem:[%s3 + $0x70] sm:$0xff]
      %v1185 = vld [vmem:[%s3 + $0x78] sm:$0xff]
      %v1186 = vld [vmem:[%s3 + $0x80] sm:$0xff]
      %v1187 = vld [vmem:[%s3 + $0x88] sm:$0xff]
      %v1188 = vld [vmem:[%s3 + $0x90] sm:$0xff]
      %v1189 = vld [vmem:[%s3 + $0x98] sm:$0xff]
      %v1190 = vld [vmem:[%s3 + $0xa0] sm:$0xff]
      %v1191 = vld [vmem:[%s3 + $0xa8] sm:$0xff]
      %v1192 = vld [vmem:[%s3 + $0xb0] sm:$0xff]
      %v1193 = vld [vmem:[%s3 + $0xb8] sm:$0xff]
      %v1194 = vld [vmem:[%s3 + $0xc0] sm:$0xff]
      %v1195 = vld [vmem:[%s3 + $0xc8] sm:$0xff]
      %v1196 = vld [vmem:[%s3 + $0xd0] sm:$0xff]
      %v1197 = vld [vmem:[%s3 + $0xd8] sm:$0xff]
      %v1198 = vld [vmem:[%s3 + $0xe0] sm:$0xff]
      %v1199 = vld [vmem:[%s3 + $0xe8] sm:$0xff]
      %v1200 = vld [vmem:[%s3 + $0xf0] sm:$0xff]
      %v1201 = vld [vmem:[%s3 + $0xf8] sm:$0xff]
      %v1202 = vld [vmem:[%s4] sm:$0x3]
      %v1204 = vlaneseq
      %v1205 = vshrl.u32 %v1204, 7
      %v1206 = vsub.s32 0, %v1205
      %v1207 = vrot.slane %v1202, %v1206
      %v1208 = vlaneseq
      %v1209 = vshrl.u32 %v1208, 7
      %v1210 = vsub.s32 1, %v1209
      %v1211 = vrot.slane %v1202, %v1210
      %1214 = vmatprep.subr.mxu0 %v1171
      %1215 = vmatpush1.msra.mxu0 %v1170
      %1216 = vmatprep.subr.mxu0 %v1173
      %1217 = vmatpush1.msra.mxu0 %v1172
      %1218 = vmatprep.subr.mxu0 %v1175
      %1219 = vmatpush1.msra.mxu0 %v1174
      %1220 = vmatprep.subr.mxu0 %v1177
      %1221 = vmatpush1.msra.mxu0 %v1176
      %1222 = vmatprep.subr.mxu0 %v1179
      %1223 = vmatpush1.msra.mxu0 %v1178
      %1224 = vmatprep.subr.mxu0 %v1181
      %1225 = vmatpush1.msra.mxu0 %v1180
      %1226 = vmatprep.subr.mxu0 %v1183
      %1227 = vmatpush1.msra.mxu0 %v1182
      %1228 = vmatprep.subr.mxu0 %v1185
      %1229 = vmatpush1.msra.mxu0 %v1184
      %1230 = vmatprep.subr.mxu0 %v1187
      %1231 = vmatpush1.msra.mxu0 %v1186
      %1232 = vmatprep.subr.mxu0 %v1189
      %1233 = vmatpush1.msra.mxu0 %v1188
      %1234 = vmatprep.subr.mxu0 %v1191
      %1235 = vmatpush1.msra.mxu0 %v1190
      %1236 = vmatprep.subr.mxu0 %v1193
      %1237 = vmatpush1.msra.mxu0 %v1192
      %1238 = vmatprep.subr.mxu0 %v1195
      %1239 = vmatpush1.msra.mxu0 %v1194
      %1240 = vmatprep.subr.mxu0 %v1197
      %1241 = vmatpush1.msra.mxu0 %v1196
      %1242 = vmatprep.subr.mxu0 %v1199
      %1243 = vmatpush1.msra.mxu0 %v1198
      %1244 = vmatprep.subr.mxu0 %v1201
      %1245 = vmatpush1.msra.mxu0 %v1200
      %1246 = vmatprep.subr.mxu0 0.0
      %1247 = vmatpush1.msra.mxu0 0.0
      %1248 = vmatprep.subr.mxu0 0.0
      %1249 = vmatpush1.msra.mxu0 0.0
      %1250 = vmatprep.subr.mxu0 0.0
      %1251 = vmatpush1.msra.mxu0 0.0
      %1252 = vmatprep.subr.mxu0 0.0
      %1253 = vmatpush1.msra.mxu0 0.0
      %1254 = vmatprep.subr.mxu0 0.0
      %1255 = vmatpush1.msra.mxu0 0.0
      %1256 = vmatprep.subr.mxu0 0.0
      %1257 = vmatpush1.msra.mxu0 0.0
      %1258 = vmatprep.subr.mxu0 0.0
      %1259 = vmatpush1.msra.mxu0 0.0
      %1260 = vmatprep.subr.mxu0 0.0
      %1261 = vmatpush1.msra.mxu0 0.0
      %1262 = vmatprep.subr.mxu0 0.0
      %1263 = vmatpush1.msra.mxu0 0.0
      %1264 = vmatprep.subr.mxu0 0.0
      %1265 = vmatpush1.msra.mxu0 0.0
      %1266 = vmatprep.subr.mxu0 0.0
      %1267 = vmatpush1.msra.mxu0 0.0
      %1268 = vmatprep.subr.mxu0 0.0
      %1269 = vmatpush1.msra.mxu0 0.0
      %1270 = vmatprep.subr.mxu0 0.0
      %1271 = vmatpush1.msra.mxu0 0.0
      %1272 = vmatprep.subr.mxu0 0.0
      %1273 = vmatpush1.msra.mxu0 0.0
      %1274 = vmatprep.subr.mxu0 0.0
      %1275 = vmatpush1.msra.mxu0 0.0
      %1276 = vmatprep.subr.mxu0 0.0
      %1277 = vmatpush1.msra.mxu0 0.0
      %1278 = vmatprep.mubr.f32.mxu0 0.0
      %1279 = vmatmul.mubr.f32.gmra.mrb[0].mxu0 %v1138
      %v1280 = vpop.f32.mrb[0].mxu0
      %v1281 = vadd.f32 %v1207, %v1280
      %v1282 = vpop.f32.mrb[0].mxu0
      %v1283 = vadd.f32 %v1211, %v1282
      %1284 = vmatprep.mubr.f32.mxu0 0.0
      %1285 = vmatmul.mubr.f32.gmra.mrb[0].mxu0 %v1139
      %v1286 = vpop.f32.mrb[0].mxu0
      %v1287 = vadd.f32 %v1207, %v1286
      %v1288 = vpop.f32.mrb[0].mxu0
      %v1289 = vadd.f32 %v1211, %v1288
      %1290 = vmatprep.mubr.f32.mxu0 0.0
      %1291 = vmatmul.mubr.f32.gmra.mrb[0].mxu0 %v1140
      %v1292 = vpop.f32.mrb[0].mxu0
      %v1293 = vadd.f32 %v1207, %v1292
      %v1294 = vpop.f32.mrb[0].mxu0
      %v1295 = vadd.f32 %v1211, %v1294
      %1296 = vmatprep.mubr.f32.mxu0 0.0
      %1297 = vmatmul.mubr.f32.gmra.mrb[0].mxu0 %v1141
      %v1298 = vpop.f32.mrb[0].mxu0
      %v1299 = vadd.f32 %v1207, %v1298
      %v1300 = vpop.f32.mrb[0].mxu0
      %v1301 = vadd.f32 %v1211, %v1300
      %1302 = vmatprep.mubr.f32.mxu0 0.0
      %1303 = vmatmul.mubr.f32.gmra.mrb[0].mxu0 %v1142
      %v1304 = vpop.f32.mrb[0].mxu0
      %v1305 = vadd.f32 %v1207, %v1304
      %v1306 = vpop.f32.mrb[0].mxu0
      %v1307 = vadd.f32 %v1211, %v1306
      %1308 = vmatprep.mubr.f32.mxu0 0.0
      %1309 = vmatmul.mubr.f32.gmra.mrb[0].mxu0 %v1143
      %v1310 = vpop.f32.mrb[0].mxu0
      %v1311 = vadd.f32 %v1207, %v1310
      %v1312 = vpop.f32.mrb[0].mxu0
      %v1313 = vadd.f32 %v1211, %v1312
      %1314 = vmatprep.mubr.f32.mxu0 0.0
      %1315 = vmatmul.mubr.f32.gmra.mrb[0].mxu0 %v1144
      %v1316 = vpop.f32.mrb[0].mxu0
      %v1317 = vadd.f32 %v1207, %v1316
      %v1318 = vpop.f32.mrb[0].mxu0
      %v1319 = vadd.f32 %v1211, %v1318
      %1320 = vmatprep.mubr.f32.mxu0 0.0
      %1321 = vmatmul.mubr.f32.gmra.mrb[0].mxu0 %v1145
      %v1322 = vpop.f32.mrb[0].mxu0
      %v1323 = vadd.f32 %v1207, %v1322
      %v1324 = vpop.f32.mrb[0].mxu0
      %v1325 = vadd.f32 %v1211, %v1324
      %1326 = vmatprep.mubr.f32.mxu0 0.0
      %1327 = vmatmul.mubr.f32.gmra.mrb[0].mxu0 %v1146
      %v1328 = vpop.f32.mrb[0].mxu0
      %v1329 = vadd.f32 %v1207, %v1328
      %v1330 = vpop.f32.mrb[0].mxu0
      %v1331 = vadd.f32 %v1211, %v1330
      %1332 = vmatprep.mubr.f32.mxu0 0.0
      %1333 = vmatmul.mubr.f32.gmra.mrb[0].mxu0 %v1147
      %v1334 = vpop.f32.mrb[0].mxu0
      %v1335 = vadd.f32 %v1207, %v1334
      %v1336 = vpop.f32.mrb[0].mxu0
      %v1337 = vadd.f32 %v1211, %v1336
      %1338 = vmatprep.mubr.f32.mxu0 0.0
      %1339 = vmatmul.mubr.f32.gmra.mrb[0].mxu0 %v1148
      %v1340 = vpop.f32.mrb[0].mxu0
      %v1341 = vadd.f32 %v1207, %v1340
      %v1342 = vpop.f32.mrb[0].mxu0
      %v1343 = vadd.f32 %v1211, %v1342
      %1344 = vmatprep.mubr.f32.mxu0 0.0
      %1345 = vmatmul.mubr.f32.gmra.mrb[0].mxu0 %v1149
      %v1346 = vpop.f32.mrb[0].mxu0
      %v1347 = vadd.f32 %v1207, %v1346
      %v1348 = vpop.f32.mrb[0].mxu0
      %v1349 = vadd.f32 %v1211, %v1348
      %1350 = vmatprep.mubr.f32.mxu0 0.0
      %1351 = vmatmul.mubr.f32.gmra.mrb[0].mxu0 %v1150
      %v1352 = vpop.f32.mrb[0].mxu0
      %v1353 = vadd.f32 %v1207, %v1352
      %v1354 = vpop.f32.mrb[0].mxu0
      %v1355 = vadd.f32 %v1211, %v1354
      %1356 = vmatprep.mubr.f32.mxu0 0.0
      %1357 = vmatmul.mubr.f32.gmra.mrb[0].mxu0 %v1151
      %v1358 = vpop.f32.mrb[0].mxu0
      %v1359 = vadd.f32 %v1207, %v1358
      %v1360 = vpop.f32.mrb[0].mxu0
      %v1361 = vadd.f32 %v1211, %v1360
      %1362 = vmatprep.mubr.f32.mxu0 0.0
      %1363 = vmatmul.mubr.f32.gmra.mrb[0].mxu0 %v1152
      %v1364 = vpop.f32.mrb[0].mxu0
      %v1365 = vadd.f32 %v1207, %v1364
      %v1366 = vpop.f32.mrb[0].mxu0
      %v1367 = vadd.f32 %v1211, %v1366
      %1368 = vmatprep.mubr.f32.mxu0 0.0
      %1369 = vmatmul.mubr.f32.gmra.mrb[0].mxu0 %v1153
      %v1370 = vpop.f32.mrb[0].mxu0
      %v1371 = vadd.f32 %v1207, %v1370
      %v1372 = vpop.f32.mrb[0].mxu0
      %v1373 = vadd.f32 %v1211, %v1372
      %1374 = vmatprep.mubr.f32.mxu0 0.0
      %1375 = vmatmul.mubr.f32.gmra.mrb[0].mxu0 %v1154
      %v1376 = vpop.f32.mrb[0].mxu0
      %v1377 = vadd.f32 %v1207, %v1376
      %v1378 = vpop.f32.mrb[0].mxu0
      %v1379 = vadd.f32 %v1211, %v1378
      %1380 = vmatprep.mubr.f32.mxu0 0.0
      %1381 = vmatmul.mubr.f32.gmra.mrb[0].mxu0 %v1155
      %v1382 = vpop.f32.mrb[0].mxu0
      %v1383 = vadd.f32 %v1207, %v1382
      %v1384 = vpop.f32.mrb[0].mxu0
      %v1385 = vadd.f32 %v1211, %v1384
      %1386 = vmatprep.mubr.f32.mxu0 0.0
      %1387 = vmatmul.mubr.f32.gmra.mrb[0].mxu0 %v1156
      %v1388 = vpop.f32.mrb[0].mxu0
      %v1389 = vadd.f32 %v1207, %v1388
      %v1390 = vpop.f32.mrb[0].mxu0
      %v1391 = vadd.f32 %v1211, %v1390
      %1392 = vmatprep.mubr.f32.mxu0 0.0
      %1393 = vmatmul.mubr.f32.gmra.mrb[0].mxu0 %v1157
      %v1394 = vpop.f32.mrb[0].mxu0
      %v1395 = vadd.f32 %v1207, %v1394
      %v1396 = vpop.f32.mrb[0].mxu0
      %v1397 = vadd.f32 %v1211, %v1396
      %1398 = vmatprep.mubr.f32.mxu0 0.0
      %1399 = vmatmul.mubr.f32.gmra.mrb[0].mxu0 %v1158
      %v1400 = vpop.f32.mrb[0].mxu0
      %v1401 = vadd.f32 %v1207, %v1400
      %v1402 = vpop.f32.mrb[0].mxu0
      %v1403 = vadd.f32 %v1211, %v1402
      %1404 = vmatprep.mubr.f32.mxu0 0.0
      %1405 = vmatmul.mubr.f32.gmra.mrb[0].mxu0 %v1159
      %v1406 = vpop.f32.mrb[0].mxu0
      %v1407 = vadd.f32 %v1207, %v1406
      %v1408 = vpop.f32.mrb[0].mxu0
      %v1409 = vadd.f32 %v1211, %v1408
      %1410 = vmatprep.mubr.f32.mxu0 0.0
      %1411 = vmatmul.mubr.f32.gmra.mrb[0].mxu0 %v1160
      %v1412 = vpop.f32.mrb[0].mxu0
      %v1413 = vadd.f32 %v1207, %v1412
      %v1414 = vpop.f32.mrb[0].mxu0
      %v1415 = vadd.f32 %v1211, %v1414
      %1416 = vmatprep.mubr.f32.mxu0 0.0
      %1417 = vmatmul.mubr.f32.gmra.mrb[0].mxu0 %v1161
      %v1418 = vpop.f32.mrb[0].mxu0
      %v1419 = vadd.f32 %v1207, %v1418
      %v1420 = vpop.f32.mrb[0].mxu0
      %v1421 = vadd.f32 %v1211, %v1420
      %1422 = vmatprep.mubr.f32.mxu0 0.0
      %1423 = vmatmul.mubr.f32.gmra.mrb[0].mxu0 %v1162
      %v1424 = vpop.f32.mrb[0].mxu0
      %v1425 = vadd.f32 %v1207, %v1424
      %v1426 = vpop.f32.mrb[0].mxu0
      %v1427 = vadd.f32 %v1211, %v1426
      %1428 = vmatprep.mubr.f32.mxu0 0.0
      %1429 = vmatmul.mubr.f32.gmra.mrb[0].mxu0 %v1163
      %v1430 = vpop.f32.mrb[0].mxu0
      %v1431 = vadd.f32 %v1207, %v1430
      %v1432 = vpop.f32.mrb[0].mxu0
      %v1433 = vadd.f32 %v1211, %v1432
      %1434 = vmatprep.mubr.f32.mxu0 0.0
      %1435 = vmatmul.mubr.f32.gmra.mrb[0].mxu0 %v1164
      %v1436 = vpop.f32.mrb[0].mxu0
      %v1437 = vadd.f32 %v1207, %v1436
      %v1438 = vpop.f32.mrb[0].mxu0
      %v1439 = vadd.f32 %v1211, %v1438
      %1440 = vmatprep.mubr.f32.mxu0 0.0
      %1441 = vmatmul.mubr.f32.gmra.mrb[0].mxu0 %v1165
      %v1442 = vpop.f32.mrb[0].mxu0
      %v1443 = vadd.f32 %v1207, %v1442
      %v1444 = vpop.f32.mrb[0].mxu0
      %v1445 = vadd.f32 %v1211, %v1444
      %1446 = vmatprep.mubr.f32.mxu0 0.0
      %1447 = vmatmul.mubr.f32.gmra.mrb[0].mxu0 %v1166
      %v1448 = vpop.f32.mrb[0].mxu0
      %v1449 = vadd.f32 %v1207, %v1448
      %v1450 = vpop.f32.mrb[0].mxu0
      %v1451 = vadd.f32 %v1211, %v1450
      %1452 = vmatprep.mubr.f32.mxu0 0.0
      %1453 = vmatmul.mubr.f32.gmra.mrb[0].mxu0 %v1167
      %v1454 = vpop.f32.mrb[0].mxu0
      %v1455 = vadd.f32 %v1207, %v1454
      %v1456 = vpop.f32.mrb[0].mxu0
      %v1457 = vadd.f32 %v1211, %v1456
      %1458 = vmatprep.mubr.f32.mxu0 0.0
      %1459 = vmatmul.mubr.f32.gmra.mrb[0].mxu0 %v1168
      %v1460 = vpop.f32.mrb[0].mxu0
      %v1461 = vadd.f32 %v1207, %v1460
      %v1462 = vpop.f32.mrb[0].mxu0
      %v1463 = vadd.f32 %v1211, %v1462
      %1464 = vmatprep.mubr.f32.mxu0 0.0
      %1465 = vmatmul.mubr.f32.gmra.mrb[0].mxu0 %v1169
      %v1466 = vpop.f32.mrb[0].mxu0
      %v1467 = vadd.f32 %v1207, %v1466
      %v1468 = vpop.f32.mrb[0].mxu0
      %v1469 = vadd.f32 %v1211, %v1468
      %1470 = vdwg.mxu0
      %v1471 = vmax.f32 %v1281, 0.0
      %v1472 = vmax.f32 %v1283, 0.0
      %v1473 = vmax.f32 %v1287, 0.0
      %v1474 = vmax.f32 %v1289, 0.0
      %v1475 = vmax.f32 %v1293, 0.0
      %v1476 = vmax.f32 %v1295, 0.0
      %v1477 = vmax.f32 %v1299, 0.0
      %v1478 = vmax.f32 %v1301, 0.0
      %v1479 = vmax.f32 %v1305, 0.0
      %v1480 = vmax.f32 %v1307, 0.0
      %v1481 = vmax.f32 %v1311, 0.0
      %v1482 = vmax.f32 %v1313, 0.0
      %v1483 = vmax.f32 %v1317, 0.0
      %v1484 = vmax.f32 %v1319, 0.0
      %v1485 = vmax.f32 %v1323, 0.0
      %v1486 = vmax.f32 %v1325, 0.0
      %v1487 = vmax.f32 %v1329, 0.0
      %v1488 = vmax.f32 %v1331, 0.0
      %v1489 = vmax.f32 %v1335, 0.0
      %v1490 = vmax.f32 %v1337, 0.0
      %v1491 = vmax.f32 %v1341, 0.0
      %v1492 = vmax.f32 %v1343, 0.0
      %v1493 = vmax.f32 %v1347, 0.0
      %v1494 = vmax.f32 %v1349, 0.0
      %v1495 = vmax.f32 %v1353, 0.0
      %v1496 = vmax.f32 %v1355, 0.0
      %v1497 = vmax.f32 %v1359, 0.0
      %v1498 = vmax.f32 %v1361, 0.0
      %v1499 = vmax.f32 %v1365, 0.0
      %v1500 = vmax.f32 %v1367, 0.0
      %v1501 = vmax.f32 %v1371, 0.0
      %v1502 = vmax.f32 %v1373, 0.0
      %v1503 = vmax.f32 %v1377, 0.0
      %v1504 = vmax.f32 %v1379, 0.0
      %v1505 = vmax.f32 %v1383, 0.0
      %v1506 = vmax.f32 %v1385, 0.0
      %v1507 = vmax.f32 %v1389, 0.0
      %v1508 = vmax.f32 %v1391, 0.0
      %v1509 = vmax.f32 %v1395, 0.0
      %v1510 = vmax.f32 %v1397, 0.0
      %v1511 = vmax.f32 %v1401, 0.0
      %v1512 = vmax.f32 %v1403, 0.0
      %v1513 = vmax.f32 %v1407, 0.0
      %v1514 = vmax.f32 %v1409, 0.0
      %v1515 = vmax.f32 %v1413, 0.0
      %v1516 = vmax.f32 %v1415, 0.0
      %v1517 = vmax.f32 %v1419, 0.0
      %v1518 = vmax.f32 %v1421, 0.0
      %v1519 = vmax.f32 %v1425, 0.0
      %v1520 = vmax.f32 %v1427, 0.0
      %v1521 = vmax.f32 %v1431, 0.0
      %v1522 = vmax.f32 %v1433, 0.0
      %v1523 = vmax.f32 %v1437, 0.0
      %v1524 = vmax.f32 %v1439, 0.0
      %v1525 = vmax.f32 %v1443, 0.0
      %v1526 = vmax.f32 %v1445, 0.0
      %v1527 = vmax.f32 %v1449, 0.0
      %v1528 = vmax.f32 %v1451, 0.0
      %v1529 = vmax.f32 %v1455, 0.0
      %v1530 = vmax.f32 %v1457, 0.0
      %v1531 = vmax.f32 %v1461, 0.0
      %v1532 = vmax.f32 %v1463, 0.0
      %v1533 = vmax.f32 %v1467, 0.0
      %v1534 = vmax.f32 %v1469, 0.0
      %v1535 = vld [vmem:[%s5] sm:$0xff]
      %v1536 = vld [vmem:[%s5 + $0x8] sm:$0xff]
      %v1537 = vld [vmem:[%s5 + $0x10] sm:$0xff]
      %v1538 = vld [vmem:[%s5 + $0x18] sm:$0xff]
      %v1539 = vld [vmem:[%s5 + $0x20] sm:$0xff]
      %v1540 = vld [vmem:[%s5 + $0x28] sm:$0xff]
      %v1541 = vld [vmem:[%s5 + $0x30] sm:$0xff]
      %v1542 = vld [vmem:[%s5 + $0x38] sm:$0xff]
      %v1543 = vld [vmem:[%s5 + $0x40] sm:$0xff]
      %v1544 = vld [vmem:[%s5 + $0x48] sm:$0xff]
      %v1545 = vld [vmem:[%s5 + $0x50] sm:$0xff]
      %v1546 = vld [vmem:[%s5 + $0x58] sm:$0xff]
      %v1547 = vld [vmem:[%s5 + $0x60] sm:$0xff]
      %v1548 = vld [vmem:[%s5 + $0x68] sm:$0xff]
      %v1549 = vld [vmem:[%s5 + $0x70] sm:$0xff]
      %v1550 = vld [vmem:[%s5 + $0x78] sm:$0xff]
      %v1551 = vld [vmem:[%s5 + $0x80] sm:$0xff]
      %v1552 = vld [vmem:[%s5 + $0x88] sm:$0xff]
      %v1553 = vld [vmem:[%s5 + $0x90] sm:$0xff]
      %v1554 = vld [vmem:[%s5 + $0x98] sm:$0xff]
      %v1555 = vld [vmem:[%s5 + $0xa0] sm:$0xff]
      %v1556 = vld [vmem:[%s5 + $0xa8] sm:$0xff]
      %v1557 = vld [vmem:[%s5 + $0xb0] sm:$0xff]
      %v1558 = vld [vmem:[%s5 + $0xb8] sm:$0xff]
      %v1559 = vld [vmem:[%s5 + $0xc0] sm:$0xff]
      %v1560 = vld [vmem:[%s5 + $0xc8] sm:$0xff]
      %v1561 = vld [vmem:[%s5 + $0xd0] sm:$0xff]
      %v1562 = vld [vmem:[%s5 + $0xd8] sm:$0xff]
      %v1563 = vld [vmem:[%s5 + $0xe0] sm:$0xff]
      %v1564 = vld [vmem:[%s5 + $0xe8] sm:$0xff]
      %v1565 = vld [vmem:[%s5 + $0xf0] sm:$0xff]
      %v1566 = vld [vmem:[%s5 + $0xf8] sm:$0xff]
      %v1567 = vld [vmem:[%s6] sm:$0x1]
      %v1569 = vlaneseq
      %v1570 = vshrl.u32 %v1569, 7
      %v1571 = vsub.s32 0, %v1570
      %v1572 = vrot.slane %v1567, %v1571
      %1574 = vmatprep.subr.mxu0 0.0
      %1575 = vmatpush1.msra.mxu0 %v1535
      %1576 = vmatprep.subr.mxu0 0.0
      %1577 = vmatpush1.msra.mxu0 %v1536
      %1578 = vmatprep.subr.mxu0 0.0
      %1579 = vmatpush1.msra.mxu0 %v1537
      %1580 = vmatprep.subr.mxu0 0.0
      %1581 = vmatpush1.msra.mxu0 %v1538
      %1582 = vmatprep.subr.mxu0 0.0
      %1583 = vmatpush1.msra.mxu0 %v1539
      %1584 = vmatprep.subr.mxu0 0.0
      %1585 = vmatpush1.msra.mxu0 %v1540
      %1586 = vmatprep.subr.mxu0 0.0
      %1587 = vmatpush1.msra.mxu0 %v1541
      %1588 = vmatprep.subr.mxu0 0.0
      %1589 = vmatpush1.msra.mxu0 %v1542
      %1590 = vmatprep.subr.mxu0 0.0
      %1591 = vmatpush1.msra.mxu0 %v1543
      %1592 = vmatprep.subr.mxu0 0.0
      %1593 = vmatpush1.msra.mxu0 %v1544
      %1594 = vmatprep.subr.mxu0 0.0
      %1595 = vmatpush1.msra.mxu0 %v1545
      %1596 = vmatprep.subr.mxu0 0.0
      %1597 = vmatpush1.msra.mxu0 %v1546
      %1598 = vmatprep.subr.mxu0 0.0
      %1599 = vmatpush1.msra.mxu0 %v1547
      %1600 = vmatprep.subr.mxu0 0.0
      %1601 = vmatpush1.msra.mxu0 %v1548
      %1602 = vmatprep.subr.mxu0 0.0
      %1603 = vmatpush1.msra.mxu0 %v1549
      %1604 = vmatprep.subr.mxu0 0.0
      %1605 = vmatpush1.msra.mxu0 %v1550
      %1606 = vmatprep.subr.mxu0 0.0
      %1607 = vmatpush1.msra.mxu0 %v1551
      %1608 = vmatprep.subr.mxu0 0.0
      %1609 = vmatpush1.msra.mxu0 %v1552
      %1610 = vmatprep.subr.mxu0 0.0
      %1611 = vmatpush1.msra.mxu0 %v1553
      %1612 = vmatprep.subr.mxu0 0.0
      %1613 = vmatpush1.msra.mxu0 %v1554
      %1614 = vmatprep.subr.mxu0 0.0
      %1615 = vmatpush1.msra.mxu0 %v1555
      %1616 = vmatprep.subr.mxu0 0.0
      %1617 = vmatpush1.msra.mxu0 %v1556
      %1618 = vmatprep.subr.mxu0 0.0
      %1619 = vmatpush1.msra.mxu0 %v1557
      %1620 = vmatprep.subr.mxu0 0.0
      %1621 = vmatpush1.msra.mxu0 %v1558
      %1622 = vmatprep.subr.mxu0 0.0
      %1623 = vmatpush1.msra.mxu0 %v1559
      %1624 = vmatprep.subr.mxu0 0.0
      %1625 = vmatpush1.msra.mxu0 %v1560
      %1626 = vmatprep.subr.mxu0 0.0
      %1627 = vmatpush1.msra.mxu0 %v1561
      %1628 = vmatprep.subr.mxu0 0.0
      %1629 = vmatpush1.msra.mxu0 %v1562
      %1630 = vmatprep.subr.mxu0 0.0
      %1631 = vmatpush1.msra.mxu0 %v1563
      %1632 = vmatprep.subr.mxu0 0.0
      %1633 = vmatpush1.msra.mxu0 %v1564
      %1634 = vmatprep.subr.mxu0 0.0
      %1635 = vmatpush1.msra.mxu0 %v1565
      %1636 = vmatprep.subr.mxu0 0.0
      %1637 = vmatpush1.msra.mxu0 %v1566
      %1638 = vmatprep.mubr.f32.mxu0 %v1472
      %1639 = vmatmul.mubr.f32.gmra.mrb[0].mxu0 %v1471
      %v1640 = vpop.f32.mrb[0].mxu0
      %v1641 = vadd.f32 %v1572, %v1640
      %v1642 = vpop.f32.mrb[0].mxu0
      %1643 = vmatprep.mubr.f32.mxu0 %v1474
      %1644 = vmatmul.mubr.f32.gmra.mrb[0].mxu0 %v1473
      %v1645 = vpop.f32.mrb[0].mxu0
      %v1646 = vadd.f32 %v1572, %v1645
      %v1647 = vpop.f32.mrb[0].mxu0
      %1648 = vmatprep.mubr.f32.mxu0 %v1476
      %1649 = vmatmul.mubr.f32.gmra.mrb[0].mxu0 %v1475
      %v1650 = vpop.f32.mrb[0].mxu0
      %v1651 = vadd.f32 %v1572, %v1650
      %v1652 = vpop.f32.mrb[0].mxu0
      %1653 = vmatprep.mubr.f32.mxu0 %v1478
      %1654 = vmatmul.mubr.f32.gmra.mrb[0].mxu0 %v1477
      %v1655 = vpop.f32.mrb[0].mxu0
      %v1656 = vadd.f32 %v1572, %v1655
      %v1657 = vpop.f32.mrb[0].mxu0
      %1658 = vmatprep.mubr.f32.mxu0 %v1480
      %1659 = vmatmul.mubr.f32.gmra.mrb[0].mxu0 %v1479
      %v1660 = vpop.f32.mrb[0].mxu0
      %v1661 = vadd.f32 %v1572, %v1660
      %v1662 = vpop.f32.mrb[0].mxu0
      %1663 = vmatprep.mubr.f32.mxu0 %v1482
      %1664 = vmatmul.mubr.f32.gmra.mrb[0].mxu0 %v1481
      %v1665 = vpop.f32.mrb[0].mxu0
      %v1666 = vadd.f32 %v1572, %v1665
      %v1667 = vpop.f32.mrb[0].mxu0
      %1668 = vmatprep.mubr.f32.mxu0 %v1484
      %1669 = vmatmul.mubr.f32.gmra.mrb[0].mxu0 %v1483
      %v1670 = vpop.f32.mrb[0].mxu0
      %v1671 = vadd.f32 %v1572, %v1670
      %v1672 = vpop.f32.mrb[0].mxu0
      %1673 = vmatprep.mubr.f32.mxu0 %v1486
      %1674 = vmatmul.mubr.f32.gmra.mrb[0].mxu0 %v1485
      %v1675 = vpop.f32.mrb[0].mxu0
      %v1676 = vadd.f32 %v1572, %v1675
      %v1677 = vpop.f32.mrb[0].mxu0
      %1678 = vmatprep.mubr.f32.mxu0 %v1488
      %1679 = vmatmul.mubr.f32.gmra.mrb[0].mxu0 %v1487
      %v1680 = vpop.f32.mrb[0].mxu0
      %v1681 = vadd.f32 %v1572, %v1680
      %v1682 = vpop.f32.mrb[0].mxu0
      %1683 = vmatprep.mubr.f32.mxu0 %v1490
      %1684 = vmatmul.mubr.f32.gmra.mrb[0].mxu0 %v1489
      %v1685 = vpop.f32.mrb[0].mxu0
      %v1686 = vadd.f32 %v1572, %v1685
      %v1687 = vpop.f32.mrb[0].mxu0
      %1688 = vmatprep.mubr.f32.mxu0 %v1492
      %1689 = vmatmul.mubr.f32.gmra.mrb[0].mxu0 %v1491
      %v1690 = vpop.f32.mrb[0].mxu0
      %v1691 = vadd.f32 %v1572, %v1690
      %v1692 = vpop.f32.mrb[0].mxu0
      %1693 = vmatprep.mubr.f32.mxu0 %v1494
      %1694 = vmatmul.mubr.f32.gmra.mrb[0].mxu0 %v1493
      %v1695 = vpop.f32.mrb[0].mxu0
      %v1696 = vadd.f32 %v1572, %v1695
      %v1697 = vpop.f32.mrb[0].mxu0
      %1698 = vmatprep.mubr.f32.mxu0 %v1496
      %1699 = vmatmul.mubr.f32.gmra.mrb[0].mxu0 %v1495
      %v1700 = vpop.f32.mrb[0].mxu0
      %v1701 = vadd.f32 %v1572, %v1700
      %v1702 = vpop.f32.mrb[0].mxu0
      %1703 = vmatprep.mubr.f32.mxu0 %v1498
      %1704 = vmatmul.mubr.f32.gmra.mrb[0].mxu0 %v1497
      %v1705 = vpop.f32.mrb[0].mxu0
      %v1706 = vadd.f32 %v1572, %v1705
      %v1707 = vpop.f32.mrb[0].mxu0
      %1708 = vmatprep.mubr.f32.mxu0 %v1500
      %1709 = vmatmul.mubr.f32.gmra.mrb[0].mxu0 %v1499
      %v1710 = vpop.f32.mrb[0].mxu0
      %v1711 = vadd.f32 %v1572, %v1710
      %v1712 = vpop.f32.mrb[0].mxu0
      %1713 = vmatprep.mubr.f32.mxu0 %v1502
      %1714 = vmatmul.mubr.f32.gmra.mrb[0].mxu0 %v1501
      %v1715 = vpop.f32.mrb[0].mxu0
      %v1716 = vadd.f32 %v1572, %v1715
      %v1717 = vpop.f32.mrb[0].mxu0
      %1718 = vmatprep.mubr.f32.mxu0 %v1504
      %1719 = vmatmul.mubr.f32.gmra.mrb[0].mxu0 %v1503
      %v1720 = vpop.f32.mrb[0].mxu0
      %v1721 = vadd.f32 %v1572, %v1720
      %v1722 = vpop.f32.mrb[0].mxu0
      %1723 = vmatprep.mubr.f32.mxu0 %v1506
      %1724 = vmatmul.mubr.f32.gmra.mrb[0].mxu0 %v1505
      %v1725 = vpop.f32.mrb[0].mxu0
      %v1726 = vadd.f32 %v1572, %v1725
      %v1727 = vpop.f32.mrb[0].mxu0
      %1728 = vmatprep.mubr.f32.mxu0 %v1508
      %1729 = vmatmul.mubr.f32.gmra.mrb[0].mxu0 %v1507
      %v1730 = vpop.f32.mrb[0].mxu0
      %v1731 = vadd.f32 %v1572, %v1730
      %v1732 = vpop.f32.mrb[0].mxu0
      %1733 = vmatprep.mubr.f32.mxu0 %v1510
      %1734 = vmatmul.mubr.f32.gmra.mrb[0].mxu0 %v1509
      %v1735 = vpop.f32.mrb[0].mxu0
      %v1736 = vadd.f32 %v1572, %v1735
      %v1737 = vpop.f32.mrb[0].mxu0
      %1738 = vmatprep.mubr.f32.mxu0 %v1512
      %1739 = vmatmul.mubr.f32.gmra.mrb[0].mxu0 %v1511
      %v1740 = vpop.f32.mrb[0].mxu0
      %v1741 = vadd.f32 %v1572, %v1740
      %v1742 = vpop.f32.mrb[0].mxu0
      %1743 = vmatprep.mubr.f32.mxu0 %v1514
      %1744 = vmatmul.mubr.f32.gmra.mrb[0].mxu0 %v1513
      %v1745 = vpop.f32.mrb[0].mxu0
      %v1746 = vadd.f32 %v1572, %v1745
      %v1747 = vpop.f32.mrb[0].mxu0
      %1748 = vmatprep.mubr.f32.mxu0 %v1516
      %1749 = vmatmul.mubr.f32.gmra.mrb[0].mxu0 %v1515
      %v1750 = vpop.f32.mrb[0].mxu0
      %v1751 = vadd.f32 %v1572, %v1750
      %v1752 = vpop.f32.mrb[0].mxu0
      %1753 = vmatprep.mubr.f32.mxu0 %v1518
      %1754 = vmatmul.mubr.f32.gmra.mrb[0].mxu0 %v1517
      %v1755 = vpop.f32.mrb[0].mxu0
      %v1756 = vadd.f32 %v1572, %v1755
      %v1757 = vpop.f32.mrb[0].mxu0
      %1758 = vmatprep.mubr.f32.mxu0 %v1520
      %1759 = vmatmul.mubr.f32.gmra.mrb[0].mxu0 %v1519
      %v1760 = vpop.f32.mrb[0].mxu0
      %v1761 = vadd.f32 %v1572, %v1760
      %v1762 = vpop.f32.mrb[0].mxu0
      %1763 = vmatprep.mubr.f32.mxu0 %v1522
      %1764 = vmatmul.mubr.f32.gmra.mrb[0].mxu0 %v1521
      %v1765 = vpop.f32.mrb[0].mxu0
      %v1766 = vadd.f32 %v1572, %v1765
      %v1767 = vpop.f32.mrb[0].mxu0
      %1768 = vmatprep.mubr.f32.mxu0 %v1524
      %1769 = vmatmul.mubr.f32.gmra.mrb[0].mxu0 %v1523
      %v1770 = vpop.f32.mrb[0].mxu0
      %v1771 = vadd.f32 %v1572, %v1770
      %v1772 = vpop.f32.mrb[0].mxu0
      %1773 = vmatprep.mubr.f32.mxu0 %v1526
      %1774 = vmatmul.mubr.f32.gmra.mrb[0].mxu0 %v1525
      %v1775 = vpop.f32.mrb[0].mxu0
      %v1776 = vadd.f32 %v1572, %v1775
      %v1777 = vpop.f32.mrb[0].mxu0
      %1778 = vmatprep.mubr.f32.mxu0 %v1528
      %1779 = vmatmul.mubr.f32.gmra.mrb[0].mxu0 %v1527
      %v1780 = vpop.f32.mrb[0].mxu0
      %v1781 = vadd.f32 %v1572, %v1780
      %v1782 = vpop.f32.mrb[0].mxu0
      %1783 = vmatprep.mubr.f32.mxu0 %v1530
      %1784 = vmatmul.mubr.f32.gmra.mrb[0].mxu0 %v1529
      %v1785 = vpop.f32.mrb[0].mxu0
      %v1786 = vadd.f32 %v1572, %v1785
      %v1787 = vpop.f32.mrb[0].mxu0
      %1788 = vmatprep.mubr.f32.mxu0 %v1532
      %1789 = vmatmul.mubr.f32.gmra.mrb[0].mxu0 %v1531
      %v1790 = vpop.f32.mrb[0].mxu0
      %v1791 = vadd.f32 %v1572, %v1790
      %v1792 = vpop.f32.mrb[0].mxu0
      %1793 = vmatprep.mubr.f32.mxu0 %v1534
      %1794 = vmatmul.mubr.f32.gmra.mrb[0].mxu0 %v1533
      %v1795 = vpop.f32.mrb[0].mxu0
      %v1796 = vadd.f32 %v1572, %v1795
      %v1797 = vpop.f32.mrb[0].mxu0
      %1798 = vdwg.mxu0
      %1799 = vst [vmem:[%s280] sm:$0xff] %v1641
      %1800 = vst [vmem:[%s280 + $0x8] sm:$0xff] %v1646
      %1801 = vst [vmem:[%s280 + $0x10] sm:$0xff] %v1651
      %1802 = vst [vmem:[%s280 + $0x18] sm:$0xff] %v1656
      %1803 = vst [vmem:[%s280 + $0x20] sm:$0xff] %v1661
      %1804 = vst [vmem:[%s280 + $0x28] sm:$0xff] %v1666
      %1805 = vst [vmem:[%s280 + $0x30] sm:$0xff] %v1671
      %1806 = vst [vmem:[%s280 + $0x38] sm:$0xff] %v1676
      %1807 = vst [vmem:[%s280 + $0x40] sm:$0xff] %v1681
      %1808 = vst [vmem:[%s280 + $0x48] sm:$0xff] %v1686
      %1809 = vst [vmem:[%s280 + $0x50] sm:$0xff] %v1691
      %1810 = vst [vmem:[%s280 + $0x58] sm:$0xff] %v1696
      %1811 = vst [vmem:[%s280 + $0x60] sm:$0xff] %v1701
      %1812 = vst [vmem:[%s280 + $0x68] sm:$0xff] %v1706
      %1813 = vst [vmem:[%s280 + $0x70] sm:$0xff] %v1711
      %1814 = vst [vmem:[%s280 + $0x78] sm:$0xff] %v1716
      %1815 = vst [vmem:[%s280 + $0x80] sm:$0xff] %v1721
      %1816 = vst [vmem:[%s280 + $0x88] sm:$0xff] %v1726
      %1817 = vst [vmem:[%s280 + $0x90] sm:$0xff] %v1731
      %1818 = vst [vmem:[%s280 + $0x98] sm:$0xff] %v1736
      %1819 = vst [vmem:[%s280 + $0xa0] sm:$0xff] %v1741
      %1820 = vst [vmem:[%s280 + $0xa8] sm:$0xff] %v1746
      %1821 = vst [vmem:[%s280 + $0xb0] sm:$0xff] %v1751
      %1822 = vst [vmem:[%s280 + $0xb8] sm:$0xff] %v1756
      %1823 = vst [vmem:[%s280 + $0xc0] sm:$0xff] %v1761
      %1824 = vst [vmem:[%s280 + $0xc8] sm:$0xff] %v1766
      %1825 = vst [vmem:[%s280 + $0xd0] sm:$0xff] %v1771
      %1826 = vst [vmem:[%s280 + $0xd8] sm:$0xff] %v1776
      %1827 = vst [vmem:[%s280 + $0xe0] sm:$0xff] %v1781
      %1828 = vst [vmem:[%s280 + $0xe8] sm:$0xff] %v1786
      %1829 = vst [vmem:[%s280 + $0xf0] sm:$0xff] %v1791
      %1830 = vst [vmem:[%s280 + $0xf8] sm:$0xff] %v1796
      %s1831 = smul.u32 32, %s18
      %p1832 = scmp.lt.s32.totalorder %s1831, 63
      %s1833 = scalar_select %p1832, %s1831, 63
      %s1834 = smul.addr %s1833, 8
      %s1835 = scalar_lea.vmem %s7, %s1834
      // Predicated region
      $region49: #{actor_forward.2} parent=47 // pred_check
        %p1836 = pneg %p188
      $region50: #{actor_forward.2} parent=47 // pred_check_branch
        %1838 = sbr.rel (%p1836) target = $region52
      $region51: #{actor_forward.2} parent=47 // pred_region
        %s1839 = smul.u32 32, %s18
      $region52: #{actor_forward.2} parent=47 // pred_fallthru
        _
    $region48: #{actor_forward.2} parent=5 // pred_fallthru
      _
    %p1840 = scmp.le.s32.totalorder 2, %s13
    // Predicated region
    $region53: #{actor_forward.2} parent=5 // pred_check
      %p1841 = pneg %p1840
    $region54: #{actor_forward.2} parent=5 // pred_check_branch
      %1843 = sbr.rel (%p1841) target = $region56
    $region55: #{actor_forward.2} parent=5 // pred_region
      %s1844 = ssub.s32 %s13, 2
      // Predicated region
      $region57: #{actor_forward.2} parent=55 // pred_check
        %p1845 = pneg %p194
      $region58: #{actor_forward.2} parent=55 // pred_check_branch
        %1847 = sbr.rel (%p1845) target = $region60
      $region59: #{actor_forward.2} parent=55 // pred_region
        %s1848 = smul.u32 32, %s19
        %p1849 = scmp.lt.s32.totalorder %s1848, 63
        %s1850 = scalar_select %p1849, %s1848, 63
        %s1851 = smul.addr %s1850, 8
        %s1852 = scalar_lea.vmem %s7, %s1851
      $region60: #{actor_forward.2} parent=55 // pred_fallthru
        _
    $region56: #{actor_forward.2} parent=5 // pred_fallthru
      _
  $region6: #{actor_forward.2} parent=0 // loop_footer
    %s17 = sadd.s32 1, %s13
  $region7: #{actor_forward.2} parent=0 // loop_footer_branch
    %12 = sbr.rel target = $region3
  $region8: #{actor_forward.2} parent=0 // loop_exit
    _

</llo_original>
